<compile_context>
chip_gen: v7x
topology: tpu7x:2x2x1
jax: 0.10.0
libtpu: 0.0.40
codegen_flags: <defaults>
</compile_context>

<pallas_src>
import functools

import jax
import jax.numpy as jnp
from jax import lax
from jax.experimental import pallas as pl

NEG_SLOPE = 0.2     # RGATConv default negative_slope
NEG_INF = -1e30     # finite "-inf" so empty rows stay NaN-free
LANE = 128          # TPU lane width


def _round_up(x, m):
    return (x + m - 1) // m * m


def rgat_conv_kernel(x_ref, whq_ref, wk_ref, adj_ref, b_ref, o_ref, *,
                     num_rel, f_pad):
    """Single-invocation RGATConv (additive self-attention, across-relation
    softmax).  All relations handled in one unrolled loop; online-softmax
    state lives in vregs/VMEM."""
    n = x_ref.shape[0]
    x = x_ref[...]                                           # [N, F_in] bf16

    # One wide bf16 MXU matmul gives every relation's node transform AND the
    # folded per-relation q scores:
    #   hq[:, r*f_pad:(r+1)*f_pad] = x @ w_r        (lane-padded to 128)
    #   hq[:, num_rel*f_pad + r]   = x @ (w_r @ q)  = qi_r
    hq = jnp.dot(x, whq_ref[...], preferred_element_type=jnp.float32)
    qi_all = hq[:, num_rel * f_pad:]                         # [N, R]

    # k scores with the *source* axis on lanes (q @ k.T style contraction),
    # so no [N,1] -> [1,N] transposes:  kjt[r, s] = x[s] . (w_r @ k)
    kjt = lax.dot_general(wk_ref[...], x, (((1,), (1,)), ((), ())),
                          preferred_element_type=jnp.float32)  # [R, N]

    m = jnp.full((n, 1), NEG_INF, jnp.float32)
    l = jnp.zeros((n, 1), jnp.float32)
    acc = jnp.zeros((n, f_pad), jnp.float32)

    # R = num_edge_type*2 is small: fully unrolled static loop, no grid steps.
    for r in range(num_rel):
        h = hq[:, r * f_pad:(r + 1) * f_pad]                 # [N, F_pad] f32
        # additive self-attention score: leaky_relu(q.h_t + k.h_s)
        s = qi_all[:, r:r + 1] + kjt[r:r + 1, :]             # [N_t, N_s]
        s = jnp.where(s > 0, s, NEG_SLOPE * s)
        # int8 edge mask for relation r; compare kept in-kernel so the HBM
        # stream stays int8 and the masked-softmax semantics are exact
        mask = adj_ref[r].astype(jnp.float32) > 0.0
        s = jnp.where(mask, s, NEG_INF)

        # online (flash-style) softmax over all incoming edges of each target
        m_new = jnp.maximum(m, s.max(axis=-1, keepdims=True))
        corr = jnp.exp(m - m_new)
        p = jnp.where(mask, jnp.exp(s - m_new), 0.0)
        l = corr * l + p.sum(axis=-1, keepdims=True)
        acc = corr * acc + jnp.dot(p.astype(jnp.bfloat16),
                                   h.astype(jnp.bfloat16),
                                   preferred_element_type=jnp.float32)
        m = m_new

    # EUP approximate reciprocal; isolated targets (l == 0, acc == 0) -> bias.
    inv_l = pl.reciprocal(jnp.maximum(l, 1e-12), approx=True)
    o_ref[...] = acc * inv_l + b_ref[...]


def rgat_conv(x, w, q, k, adj, bias):
    """One RGATConv layer.

    x:    [N, F_in]        node features (any float dtype)
    w:    [R, F_in, F_out] relation weights
    q, k: [F_out, 1]       attention vectors
    adj:  [R, N, N]        int8 mask, adj[r, t, s] != 0 <=> edge s->t, rel r
    bias: [F_out]

    Returns a lane-dense [N, F_pad] f32 slab whose first F_out columns hold
    the layer output; the remaining columns are exactly zero.
    """
    n, f_in = x.shape
    num_rel, _, f_out = w.shape
    f_pad = _round_up(max(f_out, LANE), LANE)

    w32 = w.astype(jnp.float32)
    # Fold the attention vectors into the relation weights (removes 2*R
    # single-lane matmuls and one transpose source from the kernel).
    wq = jnp.einsum("rio,od->ri", w32, q.astype(jnp.float32))     # [R, F_in]
    wk = jnp.einsum("rio,od->ri", w32, k.astype(jnp.float32))     # [R, F_in]
    # Concatenate all (lane-padded) relation weights + folded q columns into
    # one wide matrix -> a single bf16 MXU matmul inside the kernel.
    w_pad = jnp.pad(w32, ((0, 0), (0, 0), (0, f_pad - f_out)))    # [R,F_in,F_pad]
    w_wide = jnp.transpose(w_pad, (1, 0, 2)).reshape(f_in, num_rel * f_pad)
    whq = jnp.concatenate([w_wide, wq.T], axis=1)                 # [F_in, R*F_pad+R]

    b_pad = jnp.pad(bias.astype(jnp.float32),
                    (0, f_pad - f_out)).reshape(1, f_pad)

    kernel = functools.partial(rgat_conv_kernel, num_rel=num_rel, f_pad=f_pad)
    # No grid: at these sizes x, the fused weights, the int8 adjacency and the
    # online-softmax state are all VMEM resident, so a single invocation
    # avoids the per-grid-step overhead that dominated the gridded version.
    return pl.pallas_call(
        kernel,
        out_shape=jax.ShapeDtypeStruct((n, f_pad), jnp.float32),
    )(x.astype(jnp.bfloat16), whq.astype(jnp.bfloat16),
      wk.astype(jnp.bfloat16), adj, b_pad)


def rgat_forward(node_ids, adj, params):
    """RGAT.forward: embedding -> conv1 -> ReLU -> conv2."""
    x = params["node_emb"][node_ids]                          # glue gather
    h1 = rgat_conv(x, params["w1"], params["q1"], params["k1"], adj,
                   params["b1"])                              # [N, F_pad] slab
    x1 = jax.nn.relu(h1)          # padded cols stay 0; keep lane-dense slab
    # Feed the padded slab straight into conv2 by zero-padding w2's input dim
    # (zero rows x zero columns -> numerically identical, no intermediate slice).
    hidden = params["w1"].shape[2]
    w2 = params["w2"]
    w2_pad = jnp.pad(w2, ((0, 0), (0, x1.shape[1] - hidden), (0, 0)))
    h2 = rgat_conv(x1, w2_pad, params["q2"], params["k2"], adj, params["b2"])
    return h2[:, :w2.shape[2]]                                # [N, out_dim]


# ---------------- pure-JAX edge-list reference (for verification) -----------
def _bf16_round(v):
    return v.astype(jnp.bfloat16).astype(jnp.float32)


def rgat_conv_ref(x, w, q, k, adj, bias):
    """Edge-list RGATConv reference.  Operand rounding (bf16 x / w / folded
    q,k) is matched to the kernel's bf16 MXU inputs so the comparison measures
    algorithmic correctness, not dtype choice."""
    n = x.shape[0]
    r_idx, t_idx, s_idx = jnp.nonzero(adj)                    # eager, static
    xb = _bf16_round(x)
    wb = _bf16_round(w)
    wqb = _bf16_round(jnp.einsum("rio,od->ri", w, q))         # folded, like kernel
    wkb = _bf16_round(jnp.einsum("rio,od->ri", w, k))
    outj = jnp.einsum("ei,eio->eo", xb[s_idx], wb[r_idx])
    qi = jnp.einsum("ei,ei->e", xb[t_idx], wqb[r_idx])
    kj = jnp.einsum("ei,ei->e", xb[s_idx], wkb[r_idx])
    alpha = qi + kj
    alpha = jnp.where(alpha > 0, alpha, NEG_SLOPE * alpha)
    m = jax.ops.segment_max(alpha, t_idx, num_segments=n)
    e = jnp.exp(alpha - m[t_idx])
    den = jax.ops.segment_sum(e, t_idx, num_segments=n)
    a = e / den[t_idx]
    msg = a[:, None] * outj
    return jax.ops.segment_sum(msg, t_idx, num_segments=n) + bias[None, :]


def rgat_forward_ref(node_ids, adj, params):
    x = params["node_emb"][node_ids]
    x1 = rgat_conv_ref(x, params["w1"], params["q1"], params["k1"], adj,
                       params["b1"])
    x = jax.nn.relu(x1)
    return rgat_conv_ref(x, params["w2"], params["q2"], params["k2"], adj,
                         params["b2"])


def glorot(key, shape):
    fan_in, fan_out = shape[-2], shape[-1]
    a = (6.0 / (fan_in + fan_out)) ** 0.5
    return jax.random.uniform(key, shape, jnp.float32, -a, a)


if __name__ == "__main__":
    key = jax.random.PRNGKey(0)
    num_nodes, in_dim, hidden_dim, out_dim = 64, 32, 32, 32
    num_edge_type = 3                    # <= 20 -> no block decomposition
    R = num_edge_type * 2                # RGAT uses num_edge_type * 2 relations

    ks = jax.random.split(key, 9)
    params = {
        "node_emb": jax.random.normal(ks[0], (num_nodes, in_dim), jnp.float32),
        "w1": glorot(ks[1], (R, in_dim, hidden_dim)),
        "q1": glorot(ks[2], (hidden_dim, 1)),
        "k1": glorot(ks[3], (hidden_dim, 1)),
        "b1": jnp.zeros((hidden_dim,), jnp.float32),   # zeros(self.bias)
        "w2": glorot(ks[4], (R, hidden_dim, out_dim)),
        "q2": glorot(ks[5], (out_dim, 1)),
        "k2": glorot(ks[6], (out_dim, 1)),
        "b2": jnp.zeros((out_dim,), jnp.float32),
    }

    # dense adjacency mask adj[r, target, source], streamed as int8 (4x fewer
    # HBM bytes than the previous f32 stream; no wrapper-side cast pass)
    adj = (jax.random.uniform(ks[7], (R, num_nodes, num_nodes)) < 0.08
           ).astype(jnp.int8)
    node_ids = jnp.arange(num_nodes, dtype=jnp.int32)

    out = rgat_forward(node_ids, adj, params)
    out = jax.block_until_ready(out)
    assert out.shape == (num_nodes, out_dim)

    ref = rgat_forward_ref(node_ids, adj, params)
    # tolerance covers bf16 MXU operands + EUP approximate reciprocal
    assert jnp.allclose(out, ref, rtol=3e-2, atol=3e-2), (
        float(jnp.max(jnp.abs(out - ref))))

    print("KERNEL_OK")
</pallas_src>

<mosaic_0001>
module attributes {stable_mosaic.version = 11 : i64} {
  func.func @rgat_conv_kernel(%arg0: memref<64x32xbf16, #tpu.memory_space<vmem>>, %arg1: memref<32x774xbf16, #tpu.memory_space<vmem>>, %arg2: memref<6x32xbf16, #tpu.memory_space<vmem>>, %arg3: memref<6x64x64xi8, #tpu.memory_space<vmem>>, %arg4: memref<1x128xf32, #tpu.memory_space<vmem>>, %arg5: memref<64x128xf32, #tpu.memory_space<vmem>>) attributes {dimension_semantics = [], scalar_prefetch = 0 : i64, scratch_operands = 0 : i64, tpu.core_type = #tpu.core_type<tc>} {
    %c0 = arith.constant 0 : index
    %c0_0 = arith.constant 0 : index
    %0 = vector.load %arg0[%c0, %c0_0] : memref<64x32xbf16, #tpu.memory_space<vmem>>, vector<64x32xbf16>
    %c0_1 = arith.constant 0 : index
    %c0_2 = arith.constant 0 : index
    %1 = vector.load %arg1[%c0_1, %c0_2] : memref<32x774xbf16, #tpu.memory_space<vmem>>, vector<32x774xbf16>
    %cst = arith.constant dense<0.000000e+00> : vector<64x774xf32>
    %2 = tpu.matmul %0, %1, %cst {dimension_numbers = #tpu.dot_dimension_numbers<[1], [0], [0], [1], [0, 0, 1, 1], [], []>} : vector<64x32xbf16>, vector<32x774xbf16>, vector<64x774xf32> -> vector<64x774xf32>
    %3 = vector.extract_strided_slice %2 {offsets = [0, 768], sizes = [64, 6], strides = [1, 1]} : vector<64x774xf32> to vector<64x6xf32>
    %c0_3 = arith.constant 0 : index
    %c0_4 = arith.constant 0 : index
    %4 = vector.load %arg2[%c0_3, %c0_4] : memref<6x32xbf16, #tpu.memory_space<vmem>>, vector<6x32xbf16>
    %cst_5 = arith.constant dense<0.000000e+00> : vector<6x64xf32>
    %5 = tpu.matmul %4, %0, %cst_5 {dimension_numbers = #tpu.dot_dimension_numbers<[1], [1], [0], [0], [0, 0, 1, 0], [], []>} : vector<6x32xbf16>, vector<64x32xbf16>, vector<6x64xf32> -> vector<6x64xf32>
    %cst_6 = arith.constant -1.000000e+30 : f32
    %6 = vector.broadcast %cst_6 : f32 to vector<64x1xf32>
    %cst_7 = arith.constant 0.000000e+00 : f32
    %7 = vector.broadcast %cst_7 : f32 to vector<64x1xf32>
    %cst_8 = arith.constant 0.000000e+00 : f32
    %8 = vector.broadcast %cst_8 : f32 to vector<64x128xf32>
    %9 = vector.extract_strided_slice %2 {offsets = [0, 0], sizes = [64, 128], strides = [1, 1]} : vector<64x774xf32> to vector<64x128xf32>
    %10 = vector.extract_strided_slice %3 {offsets = [0, 0], sizes = [64, 1], strides = [1, 1]} : vector<64x6xf32> to vector<64x1xf32>
    %11 = vector.extract_strided_slice %5 {offsets = [0, 0], sizes = [1, 64], strides = [1, 1]} : vector<6x64xf32> to vector<1x64xf32>
    %12 = vector.broadcast %10 : vector<64x1xf32> to vector<64x64xf32>
    %13 = vector.broadcast %11 : vector<1x64xf32> to vector<64x64xf32>
    %14 = arith.addf %12, %13 : vector<64x64xf32>
    %cst_9 = arith.constant 0.000000e+00 : f32
    %15 = vector.broadcast %cst_9 : f32 to vector<64x64xf32>
    %16 = arith.cmpf ogt, %14, %15 : vector<64x64xf32>
    %cst_10 = arith.constant 2.000000e-01 : f32
    %17 = vector.broadcast %cst_10 : f32 to vector<64x64xf32>
    %18 = arith.mulf %17, %14 : vector<64x64xf32>
    %19 = arith.select %16, %14, %18 : vector<64x64xi1>, vector<64x64xf32>
    %c0_11 = arith.constant 0 : index
    %c0_12 = arith.constant 0 : index
    %c0_13 = arith.constant 0 : index
    %20 = vector.load %arg3[%c0_11, %c0_12, %c0_13] : memref<6x64x64xi8, #tpu.memory_space<vmem>>, vector<1x64x64xi8>
    %21 = vector.shape_cast %20 : vector<1x64x64xi8> to vector<64x64xi8>
    %22 = arith.sitofp %21 : vector<64x64xi8> to vector<64x64xf32>
    %cst_14 = arith.constant 0.000000e+00 : f32
    %23 = vector.broadcast %cst_14 : f32 to vector<64x64xf32>
    %24 = arith.cmpf ogt, %22, %23 : vector<64x64xf32>
    %cst_15 = arith.constant -1.000000e+30 : f32
    %25 = vector.broadcast %cst_15 : f32 to vector<64x64xf32>
    %26 = arith.select %24, %19, %25 : vector<64x64xi1>, vector<64x64xf32>
    %cst_16 = arith.constant dense<0xFF800000> : vector<64xf32>
    %27 = vector.multi_reduction <maximumf>, %26, %cst_16 [1] : vector<64x64xf32> to vector<64xf32>
    %28 = vector.shape_cast %27 : vector<64xf32> to vector<64x1xf32>
    %29 = arith.maximumf %6, %28 : vector<64x1xf32>
    %30 = arith.subf %6, %29 : vector<64x1xf32>
    %31 = math.exp %30 : vector<64x1xf32>
    %32 = vector.broadcast %29 : vector<64x1xf32> to vector<64x64xf32>
    %33 = arith.subf %26, %32 : vector<64x64xf32>
    %34 = math.exp %33 : vector<64x64xf32>
    %cst_17 = arith.constant 0.000000e+00 : f32
    %35 = vector.broadcast %cst_17 : f32 to vector<64x64xf32>
    %36 = arith.select %24, %34, %35 : vector<64x64xi1>, vector<64x64xf32>
    %37 = arith.mulf %31, %7 : vector<64x1xf32>
    %cst_18 = arith.constant dense<0.000000e+00> : vector<64xf32>
    %38 = vector.multi_reduction <add>, %36, %cst_18 [1] : vector<64x64xf32> to vector<64xf32>
    %39 = vector.shape_cast %38 : vector<64xf32> to vector<64x1xf32>
    %40 = arith.addf %37, %39 : vector<64x1xf32>
    %41 = vector.broadcast %31 : vector<64x1xf32> to vector<64x128xf32>
    %42 = arith.mulf %41, %8 : vector<64x128xf32>
    %43 = arith.truncf %36 : vector<64x64xf32> to vector<64x64xbf16>
    %44 = arith.truncf %9 : vector<64x128xf32> to vector<64x128xbf16>
    %cst_19 = arith.constant dense<0.000000e+00> : vector<64x128xf32>
    %45 = tpu.matmul %43, %44, %cst_19 {dimension_numbers = #tpu.dot_dimension_numbers<[1], [0], [0], [1], [0, 0, 1, 1], [], []>} : vector<64x64xbf16>, vector<64x128xbf16>, vector<64x128xf32> -> vector<64x128xf32>
    %46 = arith.addf %42, %45 : vector<64x128xf32>
    %47 = vector.extract_strided_slice %2 {offsets = [0, 128], sizes = [64, 128], strides = [1, 1]} : vector<64x774xf32> to vector<64x128xf32>
    %48 = vector.extract_strided_slice %3 {offsets = [0, 1], sizes = [64, 1], strides = [1, 1]} : vector<64x6xf32> to vector<64x1xf32>
    %49 = vector.extract_strided_slice %5 {offsets = [1, 0], sizes = [1, 64], strides = [1, 1]} : vector<6x64xf32> to vector<1x64xf32>
    %50 = vector.broadcast %48 : vector<64x1xf32> to vector<64x64xf32>
    %51 = vector.broadcast %49 : vector<1x64xf32> to vector<64x64xf32>
    %52 = arith.addf %50, %51 : vector<64x64xf32>
    %cst_20 = arith.constant 0.000000e+00 : f32
    %53 = vector.broadcast %cst_20 : f32 to vector<64x64xf32>
    %54 = arith.cmpf ogt, %52, %53 : vector<64x64xf32>
    %cst_21 = arith.constant 2.000000e-01 : f32
    %55 = vector.broadcast %cst_21 : f32 to vector<64x64xf32>
    %56 = arith.mulf %55, %52 : vector<64x64xf32>
    %57 = arith.select %54, %52, %56 : vector<64x64xi1>, vector<64x64xf32>
    %c1 = arith.constant 1 : index
    %c0_22 = arith.constant 0 : index
    %c0_23 = arith.constant 0 : index
    %58 = vector.load %arg3[%c1, %c0_22, %c0_23] : memref<6x64x64xi8, #tpu.memory_space<vmem>>, vector<1x64x64xi8>
    %59 = vector.shape_cast %58 : vector<1x64x64xi8> to vector<64x64xi8>
    %60 = arith.sitofp %59 : vector<64x64xi8> to vector<64x64xf32>
    %cst_24 = arith.constant 0.000000e+00 : f32
    %61 = vector.broadcast %cst_24 : f32 to vector<64x64xf32>
    %62 = arith.cmpf ogt, %60, %61 : vector<64x64xf32>
    %cst_25 = arith.constant -1.000000e+30 : f32
    %63 = vector.broadcast %cst_25 : f32 to vector<64x64xf32>
    %64 = arith.select %62, %57, %63 : vector<64x64xi1>, vector<64x64xf32>
    %cst_26 = arith.constant dense<0xFF800000> : vector<64xf32>
    %65 = vector.multi_reduction <maximumf>, %64, %cst_26 [1] : vector<64x64xf32> to vector<64xf32>
    %66 = vector.shape_cast %65 : vector<64xf32> to vector<64x1xf32>
    %67 = arith.maximumf %29, %66 : vector<64x1xf32>
    %68 = arith.subf %29, %67 : vector<64x1xf32>
    %69 = math.exp %68 : vector<64x1xf32>
    %70 = vector.broadcast %67 : vector<64x1xf32> to vector<64x64xf32>
    %71 = arith.subf %64, %70 : vector<64x64xf32>
    %72 = math.exp %71 : vector<64x64xf32>
    %cst_27 = arith.constant 0.000000e+00 : f32
    %73 = vector.broadcast %cst_27 : f32 to vector<64x64xf32>
    %74 = arith.select %62, %72, %73 : vector<64x64xi1>, vector<64x64xf32>
    %75 = arith.mulf %69, %40 : vector<64x1xf32>
    %cst_28 = arith.constant dense<0.000000e+00> : vector<64xf32>
    %76 = vector.multi_reduction <add>, %74, %cst_28 [1] : vector<64x64xf32> to vector<64xf32>
    %77 = vector.shape_cast %76 : vector<64xf32> to vector<64x1xf32>
    %78 = arith.addf %75, %77 : vector<64x1xf32>
    %79 = vector.broadcast %69 : vector<64x1xf32> to vector<64x128xf32>
    %80 = arith.mulf %79, %46 : vector<64x128xf32>
    %81 = arith.truncf %74 : vector<64x64xf32> to vector<64x64xbf16>
    %82 = arith.truncf %47 : vector<64x128xf32> to vector<64x128xbf16>
    %cst_29 = arith.constant dense<0.000000e+00> : vector<64x128xf32>
    %83 = tpu.matmul %81, %82, %cst_29 {dimension_numbers = #tpu.dot_dimension_numbers<[1], [0], [0], [1], [0, 0, 1, 1], [], []>} : vector<64x64xbf16>, vector<64x128xbf16>, vector<64x128xf32> -> vector<64x128xf32>
    %84 = arith.addf %80, %83 : vector<64x128xf32>
    %85 = vector.extract_strided_slice %2 {offsets = [0, 256], sizes = [64, 128], strides = [1, 1]} : vector<64x774xf32> to vector<64x128xf32>
    %86 = vector.extract_strided_slice %3 {offsets = [0, 2], sizes = [64, 1], strides = [1, 1]} : vector<64x6xf32> to vector<64x1xf32>
    %87 = vector.extract_strided_slice %5 {offsets = [2, 0], sizes = [1, 64], strides = [1, 1]} : vector<6x64xf32> to vector<1x64xf32>
    %88 = vector.broadcast %86 : vector<64x1xf32> to vector<64x64xf32>
    %89 = vector.broadcast %87 : vector<1x64xf32> to vector<64x64xf32>
    %90 = arith.addf %88, %89 : vector<64x64xf32>
    %cst_30 = arith.constant 0.000000e+00 : f32
    %91 = vector.broadcast %cst_30 : f32 to vector<64x64xf32>
    %92 = arith.cmpf ogt, %90, %91 : vector<64x64xf32>
    %cst_31 = arith.constant 2.000000e-01 : f32
    %93 = vector.broadcast %cst_31 : f32 to vector<64x64xf32>
    %94 = arith.mulf %93, %90 : vector<64x64xf32>
    %95 = arith.select %92, %90, %94 : vector<64x64xi1>, vector<64x64xf32>
    %c2 = arith.constant 2 : index
    %c0_32 = arith.constant 0 : index
    %c0_33 = arith.constant 0 : index
    %96 = vector.load %arg3[%c2, %c0_32, %c0_33] : memref<6x64x64xi8, #tpu.memory_space<vmem>>, vector<1x64x64xi8>
    %97 = vector.shape_cast %96 : vector<1x64x64xi8> to vector<64x64xi8>
    %98 = arith.sitofp %97 : vector<64x64xi8> to vector<64x64xf32>
    %cst_34 = arith.constant 0.000000e+00 : f32
    %99 = vector.broadcast %cst_34 : f32 to vector<64x64xf32>
    %100 = arith.cmpf ogt, %98, %99 : vector<64x64xf32>
    %cst_35 = arith.constant -1.000000e+30 : f32
    %101 = vector.broadcast %cst_35 : f32 to vector<64x64xf32>
    %102 = arith.select %100, %95, %101 : vector<64x64xi1>, vector<64x64xf32>
    %cst_36 = arith.constant dense<0xFF800000> : vector<64xf32>
    %103 = vector.multi_reduction <maximumf>, %102, %cst_36 [1] : vector<64x64xf32> to vector<64xf32>
    %104 = vector.shape_cast %103 : vector<64xf32> to vector<64x1xf32>
    %105 = arith.maximumf %67, %104 : vector<64x1xf32>
    %106 = arith.subf %67, %105 : vector<64x1xf32>
    %107 = math.exp %106 : vector<64x1xf32>
    %108 = vector.broadcast %105 : vector<64x1xf32> to vector<64x64xf32>
    %109 = arith.subf %102, %108 : vector<64x64xf32>
    %110 = math.exp %109 : vector<64x64xf32>
    %cst_37 = arith.constant 0.000000e+00 : f32
    %111 = vector.broadcast %cst_37 : f32 to vector<64x64xf32>
    %112 = arith.select %100, %110, %111 : vector<64x64xi1>, vector<64x64xf32>
    %113 = arith.mulf %107, %78 : vector<64x1xf32>
    %cst_38 = arith.constant dense<0.000000e+00> : vector<64xf32>
    %114 = vector.multi_reduction <add>, %112, %cst_38 [1] : vector<64x64xf32> to vector<64xf32>
    %115 = vector.shape_cast %114 : vector<64xf32> to vector<64x1xf32>
    %116 = arith.addf %113, %115 : vector<64x1xf32>
    %117 = vector.broadcast %107 : vector<64x1xf32> to vector<64x128xf32>
    %118 = arith.mulf %117, %84 : vector<64x128xf32>
    %119 = arith.truncf %112 : vector<64x64xf32> to vector<64x64xbf16>
    %120 = arith.truncf %85 : vector<64x128xf32> to vector<64x128xbf16>
    %cst_39 = arith.constant dense<0.000000e+00> : vector<64x128xf32>
    %121 = tpu.matmul %119, %120, %cst_39 {dimension_numbers = #tpu.dot_dimension_numbers<[1], [0], [0], [1], [0, 0, 1, 1], [], []>} : vector<64x64xbf16>, vector<64x128xbf16>, vector<64x128xf32> -> vector<64x128xf32>
    %122 = arith.addf %118, %121 : vector<64x128xf32>
    %123 = vector.extract_strided_slice %2 {offsets = [0, 384], sizes = [64, 128], strides = [1, 1]} : vector<64x774xf32> to vector<64x128xf32>
    %124 = vector.extract_strided_slice %3 {offsets = [0, 3], sizes = [64, 1], strides = [1, 1]} : vector<64x6xf32> to vector<64x1xf32>
    %125 = vector.extract_strided_slice %5 {offsets = [3, 0], sizes = [1, 64], strides = [1, 1]} : vector<6x64xf32> to vector<1x64xf32>
    %126 = vector.broadcast %124 : vector<64x1xf32> to vector<64x64xf32>
    %127 = vector.broadcast %125 : vector<1x64xf32> to vector<64x64xf32>
    %128 = arith.addf %126, %127 : vector<64x64xf32>
    %cst_40 = arith.constant 0.000000e+00 : f32
    %129 = vector.broadcast %cst_40 : f32 to vector<64x64xf32>
    %130 = arith.cmpf ogt, %128, %129 : vector<64x64xf32>
    %cst_41 = arith.constant 2.000000e-01 : f32
    %131 = vector.broadcast %cst_41 : f32 to vector<64x64xf32>
    %132 = arith.mulf %131, %128 : vector<64x64xf32>
    %133 = arith.select %130, %128, %132 : vector<64x64xi1>, vector<64x64xf32>
    %c3 = arith.constant 3 : index
    %c0_42 = arith.constant 0 : index
    %c0_43 = arith.constant 0 : index
    %134 = vector.load %arg3[%c3, %c0_42, %c0_43] : memref<6x64x64xi8, #tpu.memory_space<vmem>>, vector<1x64x64xi8>
    %135 = vector.shape_cast %134 : vector<1x64x64xi8> to vector<64x64xi8>
    %136 = arith.sitofp %135 : vector<64x64xi8> to vector<64x64xf32>
    %cst_44 = arith.constant 0.000000e+00 : f32
    %137 = vector.broadcast %cst_44 : f32 to vector<64x64xf32>
    %138 = arith.cmpf ogt, %136, %137 : vector<64x64xf32>
    %cst_45 = arith.constant -1.000000e+30 : f32
    %139 = vector.broadcast %cst_45 : f32 to vector<64x64xf32>
    %140 = arith.select %138, %133, %139 : vector<64x64xi1>, vector<64x64xf32>
    %cst_46 = arith.constant dense<0xFF800000> : vector<64xf32>
    %141 = vector.multi_reduction <maximumf>, %140, %cst_46 [1] : vector<64x64xf32> to vector<64xf32>
    %142 = vector.shape_cast %141 : vector<64xf32> to vector<64x1xf32>
    %143 = arith.maximumf %105, %142 : vector<64x1xf32>
    %144 = arith.subf %105, %143 : vector<64x1xf32>
    %145 = math.exp %144 : vector<64x1xf32>
    %146 = vector.broadcast %143 : vector<64x1xf32> to vector<64x64xf32>
    %147 = arith.subf %140, %146 : vector<64x64xf32>
    %148 = math.exp %147 : vector<64x64xf32>
    %cst_47 = arith.constant 0.000000e+00 : f32
    %149 = vector.broadcast %cst_47 : f32 to vector<64x64xf32>
    %150 = arith.select %138, %148, %149 : vector<64x64xi1>, vector<64x64xf32>
    %151 = arith.mulf %145, %116 : vector<64x1xf32>
    %cst_48 = arith.constant dense<0.000000e+00> : vector<64xf32>
    %152 = vector.multi_reduction <add>, %150, %cst_48 [1] : vector<64x64xf32> to vector<64xf32>
    %153 = vector.shape_cast %152 : vector<64xf32> to vector<64x1xf32>
    %154 = arith.addf %151, %153 : vector<64x1xf32>
    %155 = vector.broadcast %145 : vector<64x1xf32> to vector<64x128xf32>
    %156 = arith.mulf %155, %122 : vector<64x128xf32>
    %157 = arith.truncf %150 : vector<64x64xf32> to vector<64x64xbf16>
    %158 = arith.truncf %123 : vector<64x128xf32> to vector<64x128xbf16>
    %cst_49 = arith.constant dense<0.000000e+00> : vector<64x128xf32>
    %159 = tpu.matmul %157, %158, %cst_49 {dimension_numbers = #tpu.dot_dimension_numbers<[1], [0], [0], [1], [0, 0, 1, 1], [], []>} : vector<64x64xbf16>, vector<64x128xbf16>, vector<64x128xf32> -> vector<64x128xf32>
    %160 = arith.addf %156, %159 : vector<64x128xf32>
    %161 = vector.extract_strided_slice %2 {offsets = [0, 512], sizes = [64, 128], strides = [1, 1]} : vector<64x774xf32> to vector<64x128xf32>
    %162 = vector.extract_strided_slice %3 {offsets = [0, 4], sizes = [64, 1], strides = [1, 1]} : vector<64x6xf32> to vector<64x1xf32>
    %163 = vector.extract_strided_slice %5 {offsets = [4, 0], sizes = [1, 64], strides = [1, 1]} : vector<6x64xf32> to vector<1x64xf32>
    %164 = vector.broadcast %162 : vector<64x1xf32> to vector<64x64xf32>
    %165 = vector.broadcast %163 : vector<1x64xf32> to vector<64x64xf32>
    %166 = arith.addf %164, %165 : vector<64x64xf32>
    %cst_50 = arith.constant 0.000000e+00 : f32
    %167 = vector.broadcast %cst_50 : f32 to vector<64x64xf32>
    %168 = arith.cmpf ogt, %166, %167 : vector<64x64xf32>
    %cst_51 = arith.constant 2.000000e-01 : f32
    %169 = vector.broadcast %cst_51 : f32 to vector<64x64xf32>
    %170 = arith.mulf %169, %166 : vector<64x64xf32>
    %171 = arith.select %168, %166, %170 : vector<64x64xi1>, vector<64x64xf32>
    %c4 = arith.constant 4 : index
    %c0_52 = arith.constant 0 : index
    %c0_53 = arith.constant 0 : index
    %172 = vector.load %arg3[%c4, %c0_52, %c0_53] : memref<6x64x64xi8, #tpu.memory_space<vmem>>, vector<1x64x64xi8>
    %173 = vector.shape_cast %172 : vector<1x64x64xi8> to vector<64x64xi8>
    %174 = arith.sitofp %173 : vector<64x64xi8> to vector<64x64xf32>
    %cst_54 = arith.constant 0.000000e+00 : f32
    %175 = vector.broadcast %cst_54 : f32 to vector<64x64xf32>
    %176 = arith.cmpf ogt, %174, %175 : vector<64x64xf32>
    %cst_55 = arith.constant -1.000000e+30 : f32
    %177 = vector.broadcast %cst_55 : f32 to vector<64x64xf32>
    %178 = arith.select %176, %171, %177 : vector<64x64xi1>, vector<64x64xf32>
    %cst_56 = arith.constant dense<0xFF800000> : vector<64xf32>
    %179 = vector.multi_reduction <maximumf>, %178, %cst_56 [1] : vector<64x64xf32> to vector<64xf32>
    %180 = vector.shape_cast %179 : vector<64xf32> to vector<64x1xf32>
    %181 = arith.maximumf %143, %180 : vector<64x1xf32>
    %182 = arith.subf %143, %181 : vector<64x1xf32>
    %183 = math.exp %182 : vector<64x1xf32>
    %184 = vector.broadcast %181 : vector<64x1xf32> to vector<64x64xf32>
    %185 = arith.subf %178, %184 : vector<64x64xf32>
    %186 = math.exp %185 : vector<64x64xf32>
    %cst_57 = arith.constant 0.000000e+00 : f32
    %187 = vector.broadcast %cst_57 : f32 to vector<64x64xf32>
    %188 = arith.select %176, %186, %187 : vector<64x64xi1>, vector<64x64xf32>
    %189 = arith.mulf %183, %154 : vector<64x1xf32>
    %cst_58 = arith.constant dense<0.000000e+00> : vector<64xf32>
    %190 = vector.multi_reduction <add>, %188, %cst_58 [1] : vector<64x64xf32> to vector<64xf32>
    %191 = vector.shape_cast %190 : vector<64xf32> to vector<64x1xf32>
    %192 = arith.addf %189, %191 : vector<64x1xf32>
    %193 = vector.broadcast %183 : vector<64x1xf32> to vector<64x128xf32>
    %194 = arith.mulf %193, %160 : vector<64x128xf32>
    %195 = arith.truncf %188 : vector<64x64xf32> to vector<64x64xbf16>
    %196 = arith.truncf %161 : vector<64x128xf32> to vector<64x128xbf16>
    %cst_59 = arith.constant dense<0.000000e+00> : vector<64x128xf32>
    %197 = tpu.matmul %195, %196, %cst_59 {dimension_numbers = #tpu.dot_dimension_numbers<[1], [0], [0], [1], [0, 0, 1, 1], [], []>} : vector<64x64xbf16>, vector<64x128xbf16>, vector<64x128xf32> -> vector<64x128xf32>
    %198 = arith.addf %194, %197 : vector<64x128xf32>
    %199 = vector.extract_strided_slice %2 {offsets = [0, 640], sizes = [64, 128], strides = [1, 1]} : vector<64x774xf32> to vector<64x128xf32>
    %200 = vector.extract_strided_slice %3 {offsets = [0, 5], sizes = [64, 1], strides = [1, 1]} : vector<64x6xf32> to vector<64x1xf32>
    %201 = vector.extract_strided_slice %5 {offsets = [5, 0], sizes = [1, 64], strides = [1, 1]} : vector<6x64xf32> to vector<1x64xf32>
    %202 = vector.broadcast %200 : vector<64x1xf32> to vector<64x64xf32>
    %203 = vector.broadcast %201 : vector<1x64xf32> to vector<64x64xf32>
    %204 = arith.addf %202, %203 : vector<64x64xf32>
    %cst_60 = arith.constant 0.000000e+00 : f32
    %205 = vector.broadcast %cst_60 : f32 to vector<64x64xf32>
    %206 = arith.cmpf ogt, %204, %205 : vector<64x64xf32>
    %cst_61 = arith.constant 2.000000e-01 : f32
    %207 = vector.broadcast %cst_61 : f32 to vector<64x64xf32>
    %208 = arith.mulf %207, %204 : vector<64x64xf32>
    %209 = arith.select %206, %204, %208 : vector<64x64xi1>, vector<64x64xf32>
    %c5 = arith.constant 5 : index
    %c0_62 = arith.constant 0 : index
    %c0_63 = arith.constant 0 : index
    %210 = vector.load %arg3[%c5, %c0_62, %c0_63] : memref<6x64x64xi8, #tpu.memory_space<vmem>>, vector<1x64x64xi8>
    %211 = vector.shape_cast %210 : vector<1x64x64xi8> to vector<64x64xi8>
    %212 = arith.sitofp %211 : vector<64x64xi8> to vector<64x64xf32>
    %cst_64 = arith.constant 0.000000e+00 : f32
    %213 = vector.broadcast %cst_64 : f32 to vector<64x64xf32>
    %214 = arith.cmpf ogt, %212, %213 : vector<64x64xf32>
    %cst_65 = arith.constant -1.000000e+30 : f32
    %215 = vector.broadcast %cst_65 : f32 to vector<64x64xf32>
    %216 = arith.select %214, %209, %215 : vector<64x64xi1>, vector<64x64xf32>
    %cst_66 = arith.constant dense<0xFF800000> : vector<64xf32>
    %217 = vector.multi_reduction <maximumf>, %216, %cst_66 [1] : vector<64x64xf32> to vector<64xf32>
    %218 = vector.shape_cast %217 : vector<64xf32> to vector<64x1xf32>
    %219 = arith.maximumf %181, %218 : vector<64x1xf32>
    %220 = arith.subf %181, %219 : vector<64x1xf32>
    %221 = math.exp %220 : vector<64x1xf32>
    %222 = vector.broadcast %219 : vector<64x1xf32> to vector<64x64xf32>
    %223 = arith.subf %216, %222 : vector<64x64xf32>
    %224 = math.exp %223 : vector<64x64xf32>
    %cst_67 = arith.constant 0.000000e+00 : f32
    %225 = vector.broadcast %cst_67 : f32 to vector<64x64xf32>
    %226 = arith.select %214, %224, %225 : vector<64x64xi1>, vector<64x64xf32>
    %227 = arith.mulf %221, %192 : vector<64x1xf32>
    %cst_68 = arith.constant dense<0.000000e+00> : vector<64xf32>
    %228 = vector.multi_reduction <add>, %226, %cst_68 [1] : vector<64x64xf32> to vector<64xf32>
    %229 = vector.shape_cast %228 : vector<64xf32> to vector<64x1xf32>
    %230 = arith.addf %227, %229 : vector<64x1xf32>
    %231 = vector.broadcast %221 : vector<64x1xf32> to vector<64x128xf32>
    %232 = arith.mulf %231, %198 : vector<64x128xf32>
    %233 = arith.truncf %226 : vector<64x64xf32> to vector<64x64xbf16>
    %234 = arith.truncf %199 : vector<64x128xf32> to vector<64x128xbf16>
    %cst_69 = arith.constant dense<0.000000e+00> : vector<64x128xf32>
    %235 = tpu.matmul %233, %234, %cst_69 {dimension_numbers = #tpu.dot_dimension_numbers<[1], [0], [0], [1], [0, 0, 1, 1], [], []>} : vector<64x64xbf16>, vector<64x128xbf16>, vector<64x128xf32> -> vector<64x128xf32>
    %236 = arith.addf %232, %235 : vector<64x128xf32>
    %cst_70 = arith.constant 9.99999996E-13 : f32
    %237 = vector.broadcast %cst_70 : f32 to vector<64x1xf32>
    %238 = arith.maximumf %230, %237 : vector<64x1xf32>
    %239 = tpu.reciprocal %238 {approx = true} : vector<64x1xf32> -> vector<64x1xf32>
    %240 = vector.broadcast %239 : vector<64x1xf32> to vector<64x128xf32>
    %241 = arith.mulf %236, %240 : vector<64x128xf32>
    %c0_71 = arith.constant 0 : index
    %c0_72 = arith.constant 0 : index
    %242 = vector.load %arg4[%c0_71, %c0_72] : memref<1x128xf32, #tpu.memory_space<vmem>>, vector<1x128xf32>
    %243 = vector.broadcast %242 : vector<1x128xf32> to vector<64x128xf32>
    %244 = arith.addf %241, %243 : vector<64x128xf32>
    %c0_73 = arith.constant 0 : index
    %c0_74 = arith.constant 0 : index
    %245 = vector.load %arg5[%c0_73, %c0_74] : memref<64x128xf32, #tpu.memory_space<vmem>>, vector<64x128xf32>
    tpu.vector_store %arg5[%c0_73, %c0_74], %244 {strides = array<i32>} : memref<64x128xf32, #tpu.memory_space<vmem>>, vector<64x128xf32>,
    return
  }
}

</mosaic_0001>

<llo_original>
// kernel: tpu_custom_call.1
$region0: #{tpu_custom_call.1}
  #allocation0 [shape = 'u32[]', space=smem, size = 0x4, offset = 0x4, fixed_abs, tag = 'smem constant byte address 0x4 - core index']
  #allocation1 [shape = 'u32[144,128]{1,0:T(1,128)}', space=vmem, size = 0x12000, scoped, tag = 'internal scratch']
  %s0 = inlined_call_operand.vmem [shape: bf16[64,32], index: 0, kind: input, shape index: {}]
  %s1 = inlined_call_operand.hbm [shape: bf16[32,774], index: 1, kind: input, shape index: {}]
  %s2 = inlined_call_operand.vmem [shape: bf16[6,32], index: 2, kind: input, shape index: {}]
  %s3 = inlined_call_operand.hbm [shape: s8[6,64,64], index: 3, kind: input, shape index: {}]
  %s4 = inlined_call_operand.vmem [shape: f32[1,128], index: 4, kind: input, shape index: {}]
  %s5 = inlined_call_operand.hbm [shape: f32[64,128], index: 5, kind: output, shape index: {}]
  %s6 = sld [smem:[#allocation0]]
  $region38: #{tpu_custom_call.1} parent=0
    _
  %s8 = ssub.s32 1, %s6
  %s9 = scalar_select 0, %s8, %s6
  $region1: #{tpu_custom_call.1} parent=0
    #allocation2 [shape = 'u8[57344]{0}', space=vmem, size = 0xe000, scoped, tag = 'input window, operand 1, single buffered']
    #allocation3 [shape = 's32[1]{0}', space=sflag, size = 0x4, scoped, tag = 'scoped memory for tpu_custom_call.1']
    #allocation4 [shape = 's32[1]{0}', space=sflag, size = 0x4, scoped, tag = 'scoped memory for tpu_custom_call.1']
    #allocation5 [shape = 'u8[49152]{0}', space=vmem, size = 0xc000, scoped, tag = 'input window, operand 3, single buffered']
    #allocation6 [shape = 's32[1]{0}', space=sflag, size = 0x4, scoped, tag = 'scoped memory for tpu_custom_call.1']
    #allocation7 [shape = 'u8[32768]{0}', space=vmem, size = 0x8000, scoped, tag = 'output window, operand 0, single buffered']
    %10 = vsyncpa [#allocation3], 0
    %11 = vsyncpa [#allocation6], 0
    %12 = vsyncpa [#allocation4], 0
    // Predicated region
    $region2: #{tpu_custom_call.1} parent=1 // pred_check
      _
    $region3: #{tpu_custom_call.1} parent=1 // pred_check_branch
      %14 = sbr.rel (0) target = $region5
    $region4: #{tpu_custom_call.1} parent=1 // pred_region
      _
    $region5: #{tpu_custom_call.1} parent=1 // pred_fallthru
      _
    // Predicated region
    $region6: #{tpu_custom_call.1} parent=1 // pred_check
      _
    $region7: #{tpu_custom_call.1} parent=1 // pred_check_branch
      %16 = sbr.rel (0) target = $region9
    $region8: #{tpu_custom_call.1} parent=1 // pred_region
      %s18 = ssub.s32 1792, 1792
      %19 = vsyncadd [#allocation3], %s18
      %s20 = sshll.u32 [#allocation2], 4
      %s21 = int_to_ptr.vmem [resolvable:$true] %s20
      %26 = dma.hbm_to_vmem [thread:$0]  %s1, 1792, %s21, [#allocation3], 448, 448, 28
    $region9: #{tpu_custom_call.1} parent=1 // pred_fallthru
      _
    // Predicated region
    $region10: #{tpu_custom_call.1} parent=1 // pred_check
      _
    $region11: #{tpu_custom_call.1} parent=1 // pred_check_branch
      %28 = sbr.rel (0) target = $region13
    $region12: #{tpu_custom_call.1} parent=1 // pred_region
      _
    $region13: #{tpu_custom_call.1} parent=1 // pred_fallthru
      _
    // Predicated region
    $region14: #{tpu_custom_call.1} parent=1 // pred_check
      _
    $region15: #{tpu_custom_call.1} parent=1 // pred_check_branch
      %30 = sbr.rel (0) target = $region17
    $region16: #{tpu_custom_call.1} parent=1 // pred_region
      %s32 = ssub.s32 1536, 1536
      %33 = vsyncadd [#allocation6], %s32
      %s34 = sshll.u32 [#allocation5], 4
      %s35 = int_to_ptr.vmem [resolvable:$true] %s34
      %40 = dma.hbm_to_vmem [thread:$0]  %s3, 1536, %s35, [#allocation6], 128, 128, 8
    $region17: #{tpu_custom_call.1} parent=1 // pred_fallthru
      _
    // Predicated region
    $region18: #{tpu_custom_call.1} parent=1 // pred_check
      _
    $region19: #{tpu_custom_call.1} parent=1 // pred_check_branch
      %42 = sbr.rel (0) target = $region21
    $region20: #{tpu_custom_call.1} parent=1 // pred_region
      _
    $region21: #{tpu_custom_call.1} parent=1 // pred_fallthru
      _
    // Predicated region
    $region22: #{tpu_custom_call.1} parent=1 // pred_check
      _
    $region23: #{tpu_custom_call.1} parent=1 // pred_check_branch
      %44 = sbr.rel (0) target = $region25
    $region24: #{tpu_custom_call.1} parent=1 // pred_region
      %45 = dma.done [#allocation3], 1792
    $region25: #{tpu_custom_call.1} parent=1 // pred_fallthru
      _
    // Predicated region
    $region26: #{tpu_custom_call.1} parent=1 // pred_check
      _
    $region27: #{tpu_custom_call.1} parent=1 // pred_check_branch
      %47 = sbr.rel (0) target = $region29
    $region28: #{tpu_custom_call.1} parent=1 // pred_region
      %48 = dma.done [#allocation6], 1536
    $region29: #{tpu_custom_call.1} parent=1 // pred_fallthru
      _
    %v50 = vld [vmem:[%s0] sm:$0xf]
    %v51 = vld [vmem:[%s0 + $0x4] sm:$0xf]
    %v52 = vld [vmem:[%s0 + $0x8] sm:$0xf]
    %v53 = vld [vmem:[%s0 + $0xc] sm:$0xf]
    %v54 = vld [vmem:[%s0 + $0x10] sm:$0xf]
    %v55 = vld [vmem:[%s0 + $0x14] sm:$0xf]
    %v56 = vld [vmem:[%s0 + $0x18] sm:$0xf]
    %v57 = vld [vmem:[%s0 + $0x1c] sm:$0xf]
    %v58 = vld [vmem:[#allocation2] sm:$0xff]
    %v59 = vld [vmem:[#allocation2 + $0x8] sm:$0xff]
    %v60 = vld [vmem:[#allocation2 + $0x10] sm:$0xff]
    %v61 = vld [vmem:[#allocation2 + $0x18] sm:$0xf]
    %v62 = vld [vmem:[#allocation2 + $0x1c] sm:$0xff]
    %v63 = vld [vmem:[#allocation2 + $0x24] sm:$0xff]
    %v64 = vld [vmem:[#allocation2 + $0x2c] sm:$0xff]
    %v65 = vld [vmem:[#allocation2 + $0x34] sm:$0xf]
    %v66 = vld [vmem:[#allocation2 + $0x38] sm:$0xff]
    %v67 = vld [vmem:[#allocation2 + $0x40] sm:$0xff]
    %v68 = vld [vmem:[#allocation2 + $0x48] sm:$0xff]
    %v69 = vld [vmem:[#allocation2 + $0x50] sm:$0xf]
    %v70 = vld [vmem:[#allocation2 + $0x54] sm:$0xff]
    %v71 = vld [vmem:[#allocation2 + $0x5c] sm:$0xff]
    %v72 = vld [vmem:[#allocation2 + $0x64] sm:$0xff]
    %v73 = vld [vmem:[#allocation2 + $0x6c] sm:$0xf]
    %v82 = vunpack.c.l.b16 %v50
    %v83 = vunpack.c.l.b16 %v51
    %v84 = vunpack.c.l.b16 %v52
    %v85 = vunpack.c.l.b16 %v53
    %v86 = vunpack.c.l.b16 %v54
    %v87 = vunpack.c.l.b16 %v55
    %v88 = vunpack.c.l.b16 %v56
    %v89 = vunpack.c.l.b16 %v57
    %v90 = vpack.c.b16 %v83, %v82
    %v91 = vpack.c.b16 %v85, %v84
    %v92 = vpack.c.b16 %v87, %v86
    %v93 = vpack.c.b16 %v89, %v88
    %v110 = vunpack.c.l.b16 %v58
    %v111 = vunpack.c.h.b16 %v58
    %v112 = vunpack.c.l.b16 %v59
    %v113 = vunpack.c.h.b16 %v59
    %v114 = vunpack.c.l.b16 %v60
    %v115 = vunpack.c.h.b16 %v60
    %v116 = vunpack.c.l.b16 %v61
    %v117 = vunpack.c.l.b16 %v62
    %v118 = vunpack.c.h.b16 %v62
    %v119 = vunpack.c.l.b16 %v63
    %v120 = vunpack.c.h.b16 %v63
    %v121 = vunpack.c.l.b16 %v64
    %v122 = vunpack.c.h.b16 %v64
    %v123 = vunpack.c.l.b16 %v65
    %v124 = vunpack.c.l.b16 %v66
    %v125 = vunpack.c.h.b16 %v66
    %v126 = vunpack.c.l.b16 %v67
    %v127 = vunpack.c.h.b16 %v67
    %v128 = vunpack.c.l.b16 %v68
    %v129 = vunpack.c.h.b16 %v68
    %v130 = vunpack.c.l.b16 %v69
    %v131 = vunpack.c.l.b16 %v70
    %v132 = vunpack.c.h.b16 %v70
    %v133 = vunpack.c.l.b16 %v71
    %v134 = vunpack.c.h.b16 %v71
    %v135 = vunpack.c.l.b16 %v72
    %v136 = vunpack.c.h.b16 %v72
    %v137 = vunpack.c.l.b16 %v73
    %v138 = vpack.c.b16 %v117, %v110
    %v139 = vpack.c.b16 %v118, %v111
    %v140 = vpack.c.b16 %v119, %v112
    %v141 = vpack.c.b16 %v120, %v113
    %v142 = vpack.c.b16 %v121, %v114
    %v143 = vpack.c.b16 %v122, %v115
    %v144 = vpack.c.b16 %v123, %v116
    %v145 = vpack.c.b16 %v131, %v124
    %v146 = vpack.c.b16 %v132, %v125
    %v147 = vpack.c.b16 %v133, %v126
    %v148 = vpack.c.b16 %v134, %v127
    %v149 = vpack.c.b16 %v135, %v128
    %v150 = vpack.c.b16 %v136, %v129
    %v151 = vpack.c.b16 %v137, %v130
    %vm166 = vcmask 261120
    %v168 = vsel %vm166, %v90, 0
    %v171 = vsel %vm166, %v91, 0
    %v174 = vsel %vm166, %v92, 0
    %v177 = vsel %vm166, %v93, 0
    %179 = vmatprep.subr.bf16.mxu0 %v139
    %180 = vmatpush1.bf16.msra.mxu0 %v138
    %181 = vmatprep.subr.bf16.mxu0 %v146
    %182 = vmatpush1.bf16.msra.mxu0 %v145
    %183 = vmatprep.subr.bf16.mxu0 0
    %184 = vmatpush1.bf16.msra.mxu0 0
    %185 = vmatprep.subr.bf16.mxu0 0
    %186 = vmatpush1.bf16.msra.mxu0 0
    %187 = vmatprep.subr.bf16.mxu0 0
    %188 = vmatpush1.bf16.msra.mxu0 0
    %189 = vmatprep.subr.bf16.mxu0 0
    %190 = vmatpush1.bf16.msra.mxu0 0
    %191 = vmatprep.subr.bf16.mxu0 0
    %192 = vmatpush1.bf16.msra.mxu0 0
    %193 = vmatprep.subr.bf16.mxu0 0
    %194 = vmatpush1.bf16.msra.mxu0 0
    %195 = vmatprep.subr.bf16.mxu0 0
    %196 = vmatpush1.bf16.msra.mxu0 0
    %197 = vmatprep.subr.bf16.mxu0 0
    %198 = vmatpush1.bf16.msra.mxu0 0
    %199 = vmatprep.subr.bf16.mxu0 0
    %200 = vmatpush1.bf16.msra.mxu0 0
    %201 = vmatprep.subr.bf16.mxu0 0
    %202 = vmatpush1.bf16.msra.mxu0 0
    %203 = vmatprep.subr.bf16.mxu0 0
    %204 = vmatpush1.bf16.msra.mxu0 0
    %205 = vmatprep.subr.bf16.mxu0 0
    %206 = vmatpush1.bf16.msra.mxu0 0
    %207 = vmatprep.subr.bf16.mxu0 0
    %208 = vmatpush1.bf16.msra.mxu0 0
    %209 = vmatprep.subr.bf16.mxu0 0
    %210 = vmatpush1.bf16.msra.mxu0 0
    %211 = vmatprep.mubr.bf16.mxu0 0
    %212 = vmatmul.mubr.bf16.gmra.mrb[0].mxu0 %v168
    %v213 = vpop.f32.mrb[0].mxu0
    %v214 = vadd.f32 0.0, %v213
    %v215 = vpop.f32.mrb[0].mxu0
    %v216 = vadd.f32 0.0, %v215
    %v217 = vpop.f32.mrb[0].mxu0
    %v218 = vadd.f32 0.0, %v217
    %v219 = vpop.f32.mrb[0].mxu0
    %v220 = vadd.f32 0.0, %v219
    %221 = vmatprep.mubr.bf16.mxu0 0
    %222 = vmatmul.mubr.bf16.gmra.mrb[0].mxu0 %v171
    %v223 = vpop.f32.mrb[0].mxu0
    %v224 = vadd.f32 0.0, %v223
    %v225 = vpop.f32.mrb[0].mxu0
    %v226 = vadd.f32 0.0, %v225
    %v227 = vpop.f32.mrb[0].mxu0
    %v228 = vadd.f32 0.0, %v227
    %v229 = vpop.f32.mrb[0].mxu0
    %v230 = vadd.f32 0.0, %v229
    %231 = vmatprep.mubr.bf16.mxu0 0
    %232 = vmatmul.mubr.bf16.gmra.mrb[0].mxu0 %v174
    %v233 = vpop.f32.mrb[0].mxu0
    %v234 = vadd.f32 0.0, %v233
    %v235 = vpop.f32.mrb[0].mxu0
    %v236 = vadd.f32 0.0, %v235
    %v237 = vpop.f32.mrb[0].mxu0
    %v238 = vadd.f32 0.0, %v237
    %v239 = vpop.f32.mrb[0].mxu0
    %v240 = vadd.f32 0.0, %v239
    %241 = vmatprep.mubr.bf16.mxu0 0
    %242 = vmatmul.mubr.bf16.gmra.mrb[0].mxu0 %v177
    %v243 = vpop.f32.mrb[0].mxu0
    %v244 = vadd.f32 0.0, %v243
    %v245 = vpop.f32.mrb[0].mxu0
    %v246 = vadd.f32 0.0, %v245
    %v247 = vpop.f32.mrb[0].mxu0
    %v248 = vadd.f32 0.0, %v247
    %v249 = vpop.f32.mrb[0].mxu0
    %v250 = vadd.f32 0.0, %v249
    %251 = vdwg.mxu0
    %252 = vmatprep.subr.bf16.mxu0 %v141
    %253 = vmatpush1.bf16.msra.mxu0 %v140
    %254 = vmatprep.subr.bf16.mxu0 %v148
    %255 = vmatpush1.bf16.msra.mxu0 %v147
    %256 = vmatprep.subr.bf16.mxu0 0
    %257 = vmatpush1.bf16.msra.mxu0 0
    %258 = vmatprep.subr.bf16.mxu0 0
    %259 = vmatpush1.bf16.msra.mxu0 0
    %260 = vmatprep.subr.bf16.mxu0 0
    %261 = vmatpush1.bf16.msra.mxu0 0
    %262 = vmatprep.subr.bf16.mxu0 0
    %263 = vmatpush1.bf16.msra.mxu0 0
    %264 = vmatprep.subr.bf16.mxu0 0
    %265 = vmatpush1.bf16.msra.mxu0 0
    %266 = vmatprep.subr.bf16.mxu0 0
    %267 = vmatpush1.bf16.msra.mxu0 0
    %268 = vmatprep.subr.bf16.mxu0 0
    %269 = vmatpush1.bf16.msra.mxu0 0
    %270 = vmatprep.subr.bf16.mxu0 0
    %271 = vmatpush1.bf16.msra.mxu0 0
    %272 = vmatprep.subr.bf16.mxu0 0
    %273 = vmatpush1.bf16.msra.mxu0 0
    %274 = vmatprep.subr.bf16.mxu0 0
    %275 = vmatpush1.bf16.msra.mxu0 0
    %276 = vmatprep.subr.bf16.mxu0 0
    %277 = vmatpush1.bf16.msra.mxu0 0
    %278 = vmatprep.subr.bf16.mxu0 0
    %279 = vmatpush1.bf16.msra.mxu0 0
    %280 = vmatprep.subr.bf16.mxu0 0
    %281 = vmatpush1.bf16.msra.mxu0 0
    %282 = vmatprep.subr.bf16.mxu0 0
    %283 = vmatpush1.bf16.msra.mxu0 0
    %284 = vmatprep.mubr.bf16.mxu0 0
    %285 = vmatmul.mubr.bf16.gmra.mrb[0].mxu0 %v168
    %v286 = vpop.f32.mrb[0].mxu0
    %v287 = vadd.f32 0.0, %v286
    %v288 = vpop.f32.mrb[0].mxu0
    %v289 = vadd.f32 0.0, %v288
    %v290 = vpop.f32.mrb[0].mxu0
    %v291 = vadd.f32 0.0, %v290
    %v292 = vpop.f32.mrb[0].mxu0
    %v293 = vadd.f32 0.0, %v292
    %294 = vmatprep.mubr.bf16.mxu0 0
    %295 = vmatmul.mubr.bf16.gmra.mrb[0].mxu0 %v171
    %v296 = vpop.f32.mrb[0].mxu0
    %v297 = vadd.f32 0.0, %v296
    %v298 = vpop.f32.mrb[0].mxu0
    %v299 = vadd.f32 0.0, %v298
    %v300 = vpop.f32.mrb[0].mxu0
    %v301 = vadd.f32 0.0, %v300
    %v302 = vpop.f32.mrb[0].mxu0
    %v303 = vadd.f32 0.0, %v302
    %304 = vmatprep.mubr.bf16.mxu0 0
    %305 = vmatmul.mubr.bf16.gmra.mrb[0].mxu0 %v174
    %v306 = vpop.f32.mrb[0].mxu0
    %v307 = vadd.f32 0.0, %v306
    %v308 = vpop.f32.mrb[0].mxu0
    %v309 = vadd.f32 0.0, %v308
    %v310 = vpop.f32.mrb[0].mxu0
    %v311 = vadd.f32 0.0, %v310
    %v312 = vpop.f32.mrb[0].mxu0
    %v313 = vadd.f32 0.0, %v312
    %314 = vmatprep.mubr.bf16.mxu0 0
    %315 = vmatmul.mubr.bf16.gmra.mrb[0].mxu0 %v177
    %v316 = vpop.f32.mrb[0].mxu0
    %v317 = vadd.f32 0.0, %v316
    %v318 = vpop.f32.mrb[0].mxu0
    %v319 = vadd.f32 0.0, %v318
    %v320 = vpop.f32.mrb[0].mxu0
    %v321 = vadd.f32 0.0, %v320
    %v322 = vpop.f32.mrb[0].mxu0
    %v323 = vadd.f32 0.0, %v322
    %324 = vdwg.mxu0
    %325 = vmatprep.subr.bf16.mxu0 %v143
    %326 = vmatpush1.bf16.msra.mxu0 %v142
    %327 = vmatprep.subr.bf16.mxu0 %v150
    %328 = vmatpush1.bf16.msra.mxu0 %v149
    %329 = vmatprep.subr.bf16.mxu0 0
    %330 = vmatpush1.bf16.msra.mxu0 0
    %331 = vmatprep.subr.bf16.mxu0 0
    %332 = vmatpush1.bf16.msra.mxu0 0
    %333 = vmatprep.subr.bf16.mxu0 0
    %334 = vmatpush1.bf16.msra.mxu0 0
    %335 = vmatprep.subr.bf16.mxu0 0
    %336 = vmatpush1.bf16.msra.mxu0 0
    %337 = vmatprep.subr.bf16.mxu0 0
    %338 = vmatpush1.bf16.msra.mxu0 0
    %339 = vmatprep.subr.bf16.mxu0 0
    %340 = vmatpush1.bf16.msra.mxu0 0
    %341 = vmatprep.subr.bf16.mxu0 0
    %342 = vmatpush1.bf16.msra.mxu0 0
    %343 = vmatprep.subr.bf16.mxu0 0
    %344 = vmatpush1.bf16.msra.mxu0 0
    %345 = vmatprep.subr.bf16.mxu0 0
    %346 = vmatpush1.bf16.msra.mxu0 0
    %347 = vmatprep.subr.bf16.mxu0 0
    %348 = vmatpush1.bf16.msra.mxu0 0
    %349 = vmatprep.subr.bf16.mxu0 0
    %350 = vmatpush1.bf16.msra.mxu0 0
    %351 = vmatprep.subr.bf16.mxu0 0
    %352 = vmatpush1.bf16.msra.mxu0 0
    %353 = vmatprep.subr.bf16.mxu0 0
    %354 = vmatpush1.bf16.msra.mxu0 0
    %355 = vmatprep.subr.bf16.mxu0 0
    %356 = vmatpush1.bf16.msra.mxu0 0
    %357 = vmatprep.mubr.bf16.mxu0 0
    %358 = vmatmul.mubr.bf16.gmra.mrb[0].mxu0 %v168
    %v359 = vpop.f32.mrb[0].mxu0
    %v360 = vadd.f32 0.0, %v359
    %v361 = vpop.f32.mrb[0].mxu0
    %v362 = vadd.f32 0.0, %v361
    %v363 = vpop.f32.mrb[0].mxu0
    %v364 = vadd.f32 0.0, %v363
    %v365 = vpop.f32.mrb[0].mxu0
    %v366 = vadd.f32 0.0, %v365
    %367 = vmatprep.mubr.bf16.mxu0 0
    %368 = vmatmul.mubr.bf16.gmra.mrb[0].mxu0 %v171
    %v369 = vpop.f32.mrb[0].mxu0
    %v370 = vadd.f32 0.0, %v369
    %v371 = vpop.f32.mrb[0].mxu0
    %v372 = vadd.f32 0.0, %v371
    %v373 = vpop.f32.mrb[0].mxu0
    %v374 = vadd.f32 0.0, %v373
    %v375 = vpop.f32.mrb[0].mxu0
    %v376 = vadd.f32 0.0, %v375
    %377 = vmatprep.mubr.bf16.mxu0 0
    %378 = vmatmul.mubr.bf16.gmra.mrb[0].mxu0 %v174
    %v379 = vpop.f32.mrb[0].mxu0
    %v380 = vadd.f32 0.0, %v379
    %v381 = vpop.f32.mrb[0].mxu0
    %v382 = vadd.f32 0.0, %v381
    %v383 = vpop.f32.mrb[0].mxu0
    %v384 = vadd.f32 0.0, %v383
    %v385 = vpop.f32.mrb[0].mxu0
    %v386 = vadd.f32 0.0, %v385
    %387 = vmatprep.mubr.bf16.mxu0 0
    %388 = vmatmul.mubr.bf16.gmra.mrb[0].mxu0 %v177
    %v389 = vpop.f32.mrb[0].mxu0
    %v390 = vadd.f32 0.0, %v389
    %v391 = vpop.f32.mrb[0].mxu0
    %v392 = vadd.f32 0.0, %v391
    %v393 = vpop.f32.mrb[0].mxu0
    %v394 = vadd.f32 0.0, %v393
    %v395 = vpop.f32.mrb[0].mxu0
    %v396 = vadd.f32 0.0, %v395
    %397 = vdwg.mxu0
    %398 = vmatprep.subr.bf16.mxu0 0
    %399 = vmatpush1.bf16.msra.mxu0 %v144
    %400 = vmatprep.subr.bf16.mxu0 0
    %401 = vmatpush1.bf16.msra.mxu0 %v151
    %402 = vmatprep.subr.bf16.mxu0 0
    %403 = vmatpush1.bf16.msra.mxu0 0
    %404 = vmatprep.subr.bf16.mxu0 0
    %405 = vmatpush1.bf16.msra.mxu0 0
    %406 = vmatprep.subr.bf16.mxu0 0
    %407 = vmatpush1.bf16.msra.mxu0 0
    %408 = vmatprep.subr.bf16.mxu0 0
    %409 = vmatpush1.bf16.msra.mxu0 0
    %410 = vmatprep.subr.bf16.mxu0 0
    %411 = vmatpush1.bf16.msra.mxu0 0
    %412 = vmatprep.subr.bf16.mxu0 0
    %413 = vmatpush1.bf16.msra.mxu0 0
    %414 = vmatprep.subr.bf16.mxu0 0
    %415 = vmatpush1.bf16.msra.mxu0 0
    %416 = vmatprep.subr.bf16.mxu0 0
    %417 = vmatpush1.bf16.msra.mxu0 0
    %418 = vmatprep.subr.bf16.mxu0 0
    %419 = vmatpush1.bf16.msra.mxu0 0
    %420 = vmatprep.subr.bf16.mxu0 0
    %421 = vmatpush1.bf16.msra.mxu0 0
    %422 = vmatprep.subr.bf16.mxu0 0
    %423 = vmatpush1.bf16.msra.mxu0 0
    %424 = vmatprep.subr.bf16.mxu0 0
    %425 = vmatpush1.bf16.msra.mxu0 0
    %426 = vmatprep.subr.bf16.mxu0 0
    %427 = vmatpush1.bf16.msra.mxu0 0
    %428 = vmatprep.subr.bf16.mxu0 0
    %429 = vmatpush1.bf16.msra.mxu0 0
    %430 = vmatprep.mubr.bf16.mxu0 0
    %431 = vmatmul.mubr.bf16.gmra.mrb[0].mxu0 %v168
    %v432 = vpop.f32.mrb[0].mxu0
    %v433 = vadd.f32 0.0, %v432
    %v434 = vpop.f32.mrb[0].mxu0
    %v435 = vpop.f32.mrb[0].mxu0
    %v436 = vadd.f32 0.0, %v435
    %v437 = vpop.f32.mrb[0].mxu0
    %438 = vmatprep.mubr.bf16.mxu0 0
    %439 = vmatmul.mubr.bf16.gmra.mrb[0].mxu0 %v171
    %v440 = vpop.f32.mrb[0].mxu0
    %v441 = vadd.f32 0.0, %v440
    %v442 = vpop.f32.mrb[0].mxu0
    %v443 = vpop.f32.mrb[0].mxu0
    %v444 = vadd.f32 0.0, %v443
    %v445 = vpop.f32.mrb[0].mxu0
    %446 = vmatprep.mubr.bf16.mxu0 0
    %447 = vmatmul.mubr.bf16.gmra.mrb[0].mxu0 %v174
    %v448 = vpop.f32.mrb[0].mxu0
    %v449 = vadd.f32 0.0, %v448
    %v450 = vpop.f32.mrb[0].mxu0
    %v451 = vpop.f32.mrb[0].mxu0
    %v452 = vadd.f32 0.0, %v451
    %v453 = vpop.f32.mrb[0].mxu0
    %454 = vmatprep.mubr.bf16.mxu0 0
    %455 = vmatmul.mubr.bf16.gmra.mrb[0].mxu0 %v177
    %v456 = vpop.f32.mrb[0].mxu0
    %v457 = vadd.f32 0.0, %v456
    %v458 = vpop.f32.mrb[0].mxu0
    %v459 = vpop.f32.mrb[0].mxu0
    %v460 = vadd.f32 0.0, %v459
    %v461 = vpop.f32.mrb[0].mxu0
    %462 = vdwg.mxu0
    %v463 = vld [vmem:[%s2] sm:$0x7]
    %v465 = vsel %vm166, %v463, 0
    %467 = vmatprep.subr.bf16.mxu0 0
    %468 = vmatpush1.bf16.xpose.msra.mxu0 %v168
    %469 = vmatprep.subr.bf16.mxu0 0
    %470 = vmatpush1.bf16.xpose.msra.mxu0 %v171
    %471 = vmatprep.subr.bf16.mxu0 0
    %472 = vmatpush1.bf16.xpose.msra.mxu0 %v174
    %473 = vmatprep.subr.bf16.mxu0 0
    %474 = vmatpush1.bf16.xpose.msra.mxu0 %v177
    %475 = vmatprep.subr.bf16.mxu0 0
    %476 = vmatpush1.bf16.xpose.msra.mxu0 0
    %477 = vmatprep.subr.bf16.mxu0 0
    %478 = vmatpush1.bf16.xpose.msra.mxu0 0
    %479 = vmatprep.subr.bf16.mxu0 0
    %480 = vmatpush1.bf16.xpose.msra.mxu0 0
    %481 = vmatprep.subr.bf16.mxu0 0
    %482 = vmatpush1.bf16.xpose.msra.mxu0 0
    %483 = vmatprep.subr.bf16.mxu0 0
    %484 = vmatpush1.bf16.xpose.msra.mxu0 0
    %485 = vmatprep.subr.bf16.mxu0 0
    %486 = vmatpush1.bf16.xpose.msra.mxu0 0
    %487 = vmatprep.subr.bf16.mxu0 0
    %488 = vmatpush1.bf16.xpose.msra.mxu0 0
    %489 = vmatprep.subr.bf16.mxu0 0
    %490 = vmatpush1.bf16.xpose.msra.mxu0 0
    %491 = vmatprep.subr.bf16.mxu0 0
    %492 = vmatpush1.bf16.xpose.msra.mxu0 0
    %493 = vmatprep.subr.bf16.mxu0 0
    %494 = vmatpush1.bf16.xpose.msra.mxu0 0
    %495 = vmatprep.subr.bf16.mxu0 0
    %496 = vmatpush1.bf16.xpose.msra.mxu0 0
    %497 = vmatprep.subr.bf16.mxu0 0
    %498 = vmatpush1.bf16.xpose.msra.mxu0 0
    %499 = vmatprep.mubr.bf16.mxu0 0
    %500 = vmatmul.mubr.bf16.gmra.mrb[0].mxu0 %v465
    %v501 = vpop.f32.mrb[0].mxu0
    %v502 = vadd.f32 0.0, %v501
    %v503 = vpop.f32.mrb[0].mxu0
    %v504 = vpop.f32.mrb[0].mxu0
    %v505 = vpop.f32.mrb[0].mxu0
    %506 = vdwg.mxu0
    %508 = vset.pattern.permute.xlu0 0
    %509 = vperm.xlu0 %508, %v433
    %v510 = vpop.permute.xlu0 %509
    %513 = vset.pattern.permute.xlu0 0
    %514 = vperm.xlu0 %513, %v436
    %v515 = vpop.permute.xlu0 %514
    %518 = vset.pattern.permute.xlu0 0
    %519 = vperm.xlu0 %518, %v441
    %v520 = vpop.permute.xlu0 %519
    %523 = vset.pattern.permute.xlu0 0
    %524 = vperm.xlu0 %523, %v444
    %v525 = vpop.permute.xlu0 %524
    %528 = vset.pattern.permute.xlu0 0
    %529 = vperm.xlu0 %528, %v449
    %v530 = vpop.permute.xlu0 %529
    %533 = vset.pattern.permute.xlu0 0
    %534 = vperm.xlu0 %533, %v452
    %v535 = vpop.permute.xlu0 %534
    %538 = vset.pattern.permute.xlu0 0
    %539 = vperm.xlu0 %538, %v457
    %v540 = vpop.permute.xlu0 %539
    %543 = vset.pattern.permute.xlu0 0
    %544 = vperm.xlu0 %543, %v460
    %v545 = vpop.permute.xlu0 %544
    %v547 = vlaneseq
    %v548 = vshrl.u32 %v547, 7
    %v549 = vsub.s32 0, %v548
    %v550 = vrot.slane %v502, %v549
    %v551 = vadd.f32 %v510, %v550
    %v552 = vadd.f32 %v515, %v550
    %v553 = vadd.f32 %v520, %v550
    %v554 = vadd.f32 %v525, %v550
    %v555 = vadd.f32 %v530, %v550
    %v556 = vadd.f32 %v535, %v550
    %v557 = vadd.f32 %v540, %v550
    %v558 = vadd.f32 %v545, %v550
    %vm559 = vcmp.gt.f32.partialorder %v551, 0.0
    %vm560 = vcmp.gt.f32.partialorder %v552, 0.0
    %vm561 = vcmp.gt.f32.partialorder %v553, 0.0
    %vm562 = vcmp.gt.f32.partialorder %v554, 0.0
    %vm563 = vcmp.gt.f32.partialorder %v555, 0.0
    %vm564 = vcmp.gt.f32.partialorder %v556, 0.0
    %vm565 = vcmp.gt.f32.partialorder %v557, 0.0
    %vm566 = vcmp.gt.f32.partialorder %v558, 0.0
    %v567 = vmul.f32 %v551, 0.2
    %v568 = vmul.f32 %v552, 0.2
    %v569 = vmul.f32 %v553, 0.2
    %v570 = vmul.f32 %v554, 0.2
    %v571 = vmul.f32 %v555, 0.2
    %v572 = vmul.f32 %v556, 0.2
    %v573 = vmul.f32 %v557, 0.2
    %v574 = vmul.f32 %v558, 0.2
    %v575 = vsel %vm559, %v551, %v567
    %v576 = vsel %vm560, %v552, %v568
    %v577 = vsel %vm561, %v553, %v569
    %v578 = vsel %vm562, %v554, %v570
    %v579 = vsel %vm563, %v555, %v571
    %v580 = vsel %vm564, %v556, %v572
    %v581 = vsel %vm565, %v557, %v573
    %v582 = vsel %vm566, %v558, %v574
    %v583 = vld [vmem:[#allocation5] sm:$0xff]
    %v584 = vld [vmem:[#allocation5 + $0x8] sm:$0xff]
    %v585 = vunpack.c.0.s8 %v583
    %v586 = vunpack.c.1.s8 %v583
    %v587 = vunpack.c.2.s8 %v583
    %v588 = vunpack.c.3.s8 %v583
    %v589 = vunpack.c.0.s8 %v584
    %v590 = vunpack.c.1.s8 %v584
    %v591 = vunpack.c.2.s8 %v584
    %v592 = vunpack.c.3.s8 %v584
    %v593 = vcvt.s32.f32 %v585
    %v594 = vcvt.s32.f32 %v586
    %v595 = vcvt.s32.f32 %v587
    %v596 = vcvt.s32.f32 %v588
    %v597 = vcvt.s32.f32 %v589
    %v598 = vcvt.s32.f32 %v590
    %v599 = vcvt.s32.f32 %v591
    %v600 = vcvt.s32.f32 %v592
    %vm601 = vcmp.gt.f32.partialorder %v593, 0.0
    %vm602 = vcmp.gt.f32.partialorder %v594, 0.0
    %vm603 = vcmp.gt.f32.partialorder %v595, 0.0
    %vm604 = vcmp.gt.f32.partialorder %v596, 0.0
    %vm605 = vcmp.gt.f32.partialorder %v597, 0.0
    %vm606 = vcmp.gt.f32.partialorder %v598, 0.0
    %vm607 = vcmp.gt.f32.partialorder %v599, 0.0
    %vm608 = vcmp.gt.f32.partialorder %v600, 0.0
    %v609 = vsel %vm601, %v575, -1e+30
    %v610 = vsel %vm602, %v576, -1e+30
    %v611 = vsel %vm603, %v577, -1e+30
    %v612 = vsel %vm604, %v578, -1e+30
    %v613 = vsel %vm605, %v579, -1e+30
    %v614 = vsel %vm606, %v580, -1e+30
    %v615 = vsel %vm607, %v581, -1e+30
    %v616 = vsel %vm608, %v582, -1e+30
    %vm617 = vcmask 523264
    %v618 = vsel %vm617, %v609, -inf
    %619 = vmax.xlane.f32.xlu0 %v618
    %v620 = vpop.xlane.xlu0 %619
    %v621 = vsel %vm617, %v610, -inf
    %622 = vmax.xlane.f32.xlu0 %v621
    %v623 = vpop.xlane.xlu0 %622
    %v624 = vsel %vm617, %v611, -inf
    %625 = vmax.xlane.f32.xlu0 %v624
    %v626 = vpop.xlane.xlu0 %625
    %v627 = vsel %vm617, %v612, -inf
    %628 = vmax.xlane.f32.xlu0 %v627
    %v629 = vpop.xlane.xlu0 %628
    %v630 = vsel %vm617, %v613, -inf
    %631 = vmax.xlane.f32.xlu0 %v630
    %v632 = vpop.xlane.xlu0 %631
    %v633 = vsel %vm617, %v614, -inf
    %634 = vmax.xlane.f32.xlu0 %v633
    %v635 = vpop.xlane.xlu0 %634
    %v636 = vsel %vm617, %v615, -inf
    %637 = vmax.xlane.f32.xlu0 %v636
    %v638 = vpop.xlane.xlu0 %637
    %v639 = vsel %vm617, %v616, -inf
    %640 = vmax.xlane.f32.xlu0 %v639
    %v641 = vpop.xlane.xlu0 %640
    %v642 = vmax.f32 %v620, -1e+30
    %v643 = vmax.f32 %v623, -1e+30
    %v644 = vmax.f32 %v626, -1e+30
    %v645 = vmax.f32 %v629, -1e+30
    %v646 = vmax.f32 %v632, -1e+30
    %v647 = vmax.f32 %v635, -1e+30
    %v648 = vmax.f32 %v638, -1e+30
    %v649 = vmax.f32 %v641, -1e+30
    %v650 = vsub.f32 -1e+30, %v642
    %v651 = vsub.f32 -1e+30, %v643
    %v652 = vsub.f32 -1e+30, %v644
    %v653 = vsub.f32 -1e+30, %v645
    %v654 = vsub.f32 -1e+30, %v646
    %v655 = vsub.f32 -1e+30, %v647
    %v656 = vsub.f32 -1e+30, %v648
    %v657 = vsub.f32 -1e+30, %v649
    %v658 = vmul.f32 %v650, 1.442695
    %v659 = vpow.pop %v658
    %v660 = vmul.f32 %v651, 1.442695
    %v661 = vpow.pop %v660
    %v662 = vmul.f32 %v652, 1.442695
    %v663 = vpow.pop %v662
    %v664 = vmul.f32 %v653, 1.442695
    %v665 = vpow.pop %v664
    %v666 = vmul.f32 %v654, 1.442695
    %v667 = vpow.pop %v666
    %v668 = vmul.f32 %v655, 1.442695
    %v669 = vpow.pop %v668
    %v670 = vmul.f32 %v656, 1.442695
    %v671 = vpow.pop %v670
    %v672 = vmul.f32 %v657, 1.442695
    %v673 = vpow.pop %v672
    %v674 = vsub.f32 %v609, %v642
    %v675 = vsub.f32 %v610, %v643
    %v676 = vsub.f32 %v611, %v644
    %v677 = vsub.f32 %v612, %v645
    %v678 = vsub.f32 %v613, %v646
    %v679 = vsub.f32 %v614, %v647
    %v680 = vsub.f32 %v615, %v648
    %v681 = vsub.f32 %v616, %v649
    %v682 = vmul.f32 %v674, 1.442695
    %v683 = vpow.pop %v682
    %v684 = vmul.f32 %v675, 1.442695
    %v685 = vpow.pop %v684
    %v686 = vmul.f32 %v676, 1.442695
    %v687 = vpow.pop %v686
    %v688 = vmul.f32 %v677, 1.442695
    %v689 = vpow.pop %v688
    %v690 = vmul.f32 %v678, 1.442695
    %v691 = vpow.pop %v690
    %v692 = vmul.f32 %v679, 1.442695
    %v693 = vpow.pop %v692
    %v694 = vmul.f32 %v680, 1.442695
    %v695 = vpow.pop %v694
    %v696 = vmul.f32 %v681, 1.442695
    %v697 = vpow.pop %v696
    %v698 = vsel %vm601, %v683, 0.0
    %v699 = vsel %vm602, %v685, 0.0
    %v700 = vsel %vm603, %v687, 0.0
    %v701 = vsel %vm604, %v689, 0.0
    %v702 = vsel %vm605, %v691, 0.0
    %v703 = vsel %vm606, %v693, 0.0
    %v704 = vsel %vm607, %v695, 0.0
    %v705 = vsel %vm608, %v697, 0.0
    %v706 = vmul.f32 %v659, 0.0
    %v707 = vmul.f32 %v661, 0.0
    %v708 = vmul.f32 %v663, 0.0
    %v709 = vmul.f32 %v665, 0.0
    %v710 = vmul.f32 %v667, 0.0
    %v711 = vmul.f32 %v669, 0.0
    %v712 = vmul.f32 %v671, 0.0
    %v713 = vmul.f32 %v673, 0.0
    %v714 = vsel %vm617, %v698, 0.0
    %715 = vadd.xlane.f32.xlu0 %v714
    %v716 = vpop.xlane.xlu0 %715
    %v717 = vsel %vm617, %v699, 0.0
    %718 = vadd.xlane.f32.xlu0 %v717
    %v719 = vpop.xlane.xlu0 %718
    %v720 = vsel %vm617, %v700, 0.0
    %721 = vadd.xlane.f32.xlu0 %v720
    %v722 = vpop.xlane.xlu0 %721
    %v723 = vsel %vm617, %v701, 0.0
    %724 = vadd.xlane.f32.xlu0 %v723
    %v725 = vpop.xlane.xlu0 %724
    %v726 = vsel %vm617, %v702, 0.0
    %727 = vadd.xlane.f32.xlu0 %v726
    %v728 = vpop.xlane.xlu0 %727
    %v729 = vsel %vm617, %v703, 0.0
    %730 = vadd.xlane.f32.xlu0 %v729
    %v731 = vpop.xlane.xlu0 %730
    %v732 = vsel %vm617, %v704, 0.0
    %733 = vadd.xlane.f32.xlu0 %v732
    %v734 = vpop.xlane.xlu0 %733
    %v735 = vsel %vm617, %v705, 0.0
    %736 = vadd.xlane.f32.xlu0 %v735
    %v737 = vpop.xlane.xlu0 %736
    %v738 = vadd.f32 %v706, %v716
    %v739 = vadd.f32 %v707, %v719
    %v740 = vadd.f32 %v708, %v722
    %v741 = vadd.f32 %v709, %v725
    %v742 = vadd.f32 %v710, %v728
    %v743 = vadd.f32 %v711, %v731
    %v744 = vadd.f32 %v712, %v734
    %v745 = vadd.f32 %v713, %v737
    %v746 = vpack.c.bf16 %v699, %v698
    %v747 = vpack.c.bf16 %v701, %v700
    %v748 = vpack.c.bf16 %v703, %v702
    %v749 = vpack.c.bf16 %v705, %v704
    %v750 = vpack.c.bf16 %v218, %v214
    %v751 = vpack.c.bf16 %v228, %v224
    %v752 = vpack.c.bf16 %v238, %v234
    %v753 = vpack.c.bf16 %v248, %v244
    %v755 = vsel %vm617, %v746, 0
    %v758 = vsel %vm617, %v747, 0
    %v761 = vsel %vm617, %v748, 0
    %v764 = vsel %vm617, %v749, 0
    %766 = vmatprep.subr.bf16.mxu0 0
    %767 = vmatpush1.bf16.msra.mxu0 %v750
    %768 = vmatprep.subr.bf16.mxu0 0
    %769 = vmatpush1.bf16.msra.mxu0 %v751
    %770 = vmatprep.subr.bf16.mxu0 0
    %771 = vmatpush1.bf16.msra.mxu0 %v752
    %772 = vmatprep.subr.bf16.mxu0 0
    %773 = vmatpush1.bf16.msra.mxu0 %v753
    %774 = vmatprep.subr.bf16.mxu0 0
    %775 = vmatpush1.bf16.msra.mxu0 0
    %776 = vmatprep.subr.bf16.mxu0 0
    %777 = vmatpush1.bf16.msra.mxu0 0
    %778 = vmatprep.subr.bf16.mxu0 0
    %779 = vmatpush1.bf16.msra.mxu0 0
    %780 = vmatprep.subr.bf16.mxu0 0
    %781 = vmatpush1.bf16.msra.mxu0 0
    %782 = vmatprep.subr.bf16.mxu0 0
    %783 = vmatpush1.bf16.msra.mxu0 0
    %784 = vmatprep.subr.bf16.mxu0 0
    %785 = vmatpush1.bf16.msra.mxu0 0
    %786 = vmatprep.subr.bf16.mxu0 0
    %787 = vmatpush1.bf16.msra.mxu0 0
    %788 = vmatprep.subr.bf16.mxu0 0
    %789 = vmatpush1.bf16.msra.mxu0 0
    %790 = vmatprep.subr.bf16.mxu0 0
    %791 = vmatpush1.bf16.msra.mxu0 0
    %792 = vmatprep.subr.bf16.mxu0 0
    %793 = vmatpush1.bf16.msra.mxu0 0
    %794 = vmatprep.subr.bf16.mxu0 0
    %795 = vmatpush1.bf16.msra.mxu0 0
    %796 = vmatprep.subr.bf16.mxu0 0
    %797 = vmatpush1.bf16.msra.mxu0 0
    %798 = vmatprep.mubr.bf16.mxu0 0
    %799 = vmatmul.mubr.bf16.gmra.mrb[0].mxu0 %v755
    %v800 = vpop.f32.mrb[0].mxu0
    %v801 = vadd.f32 0.0, %v800
    %v802 = vpop.f32.mrb[0].mxu0
    %v803 = vpop.f32.mrb[0].mxu0
    %v804 = vadd.f32 0.0, %v803
    %v805 = vpop.f32.mrb[0].mxu0
    %806 = vmatprep.mubr.bf16.mxu0 0
    %807 = vmatmul.mubr.bf16.gmra.mrb[0].mxu0 %v758
    %v808 = vpop.f32.mrb[0].mxu0
    %v809 = vadd.f32 0.0, %v808
    %v810 = vpop.f32.mrb[0].mxu0
    %v811 = vpop.f32.mrb[0].mxu0
    %v812 = vadd.f32 0.0, %v811
    %v813 = vpop.f32.mrb[0].mxu0
    %814 = vmatprep.mubr.bf16.mxu0 0
    %815 = vmatmul.mubr.bf16.gmra.mrb[0].mxu0 %v761
    %v816 = vpop.f32.mrb[0].mxu0
    %v817 = vadd.f32 0.0, %v816
    %v818 = vpop.f32.mrb[0].mxu0
    %v819 = vpop.f32.mrb[0].mxu0
    %v820 = vadd.f32 0.0, %v819
    %v821 = vpop.f32.mrb[0].mxu0
    %822 = vmatprep.mubr.bf16.mxu0 0
    %823 = vmatmul.mubr.bf16.gmra.mrb[0].mxu0 %v764
    %v824 = vpop.f32.mrb[0].mxu0
    %v825 = vadd.f32 0.0, %v824
    %v826 = vpop.f32.mrb[0].mxu0
    %v827 = vpop.f32.mrb[0].mxu0
    %v828 = vadd.f32 0.0, %v827
    %v829 = vpop.f32.mrb[0].mxu0
    %830 = vdwg.mxu0
    %v831 = vadd.f32 %v706, %v801
    %v832 = vadd.f32 %v707, %v804
    %v833 = vadd.f32 %v708, %v809
    %v834 = vadd.f32 %v709, %v812
    %v835 = vadd.f32 %v710, %v817
    %v836 = vadd.f32 %v711, %v820
    %v837 = vadd.f32 %v712, %v825
    %v838 = vadd.f32 %v713, %v828
    %839 = vset.pattern.permute.xlu0 1
    %840 = vperm.xlu0 %839, %v433
    %v841 = vpop.permute.xlu0 %840
    %843 = vset.pattern.permute.xlu0 1
    %844 = vperm.xlu0 %843, %v436
    %v845 = vpop.permute.xlu0 %844
    %847 = vset.pattern.permute.xlu0 1
    %848 = vperm.xlu0 %847, %v441
    %v849 = vpop.permute.xlu0 %848
    %851 = vset.pattern.permute.xlu0 1
    %852 = vperm.xlu0 %851, %v444
    %v853 = vpop.permute.xlu0 %852
    %855 = vset.pattern.permute.xlu0 1
    %856 = vperm.xlu0 %855, %v449
    %v857 = vpop.permute.xlu0 %856
    %859 = vset.pattern.permute.xlu0 1
    %860 = vperm.xlu0 %859, %v452
    %v861 = vpop.permute.xlu0 %860
    %863 = vset.pattern.permute.xlu0 1
    %864 = vperm.xlu0 %863, %v457
    %v865 = vpop.permute.xlu0 %864
    %867 = vset.pattern.permute.xlu0 1
    %868 = vperm.xlu0 %867, %v460
    %v869 = vpop.permute.xlu0 %868
    %v871 = vlaneseq
    %v872 = vshrl.u32 %v871, 7
    %v873 = vsub.s32 1, %v872
    %v874 = vrot.slane %v502, %v873
    %v875 = vadd.f32 %v841, %v874
    %v876 = vadd.f32 %v845, %v874
    %v877 = vadd.f32 %v849, %v874
    %v878 = vadd.f32 %v853, %v874
    %v879 = vadd.f32 %v857, %v874
    %v880 = vadd.f32 %v861, %v874
    %v881 = vadd.f32 %v865, %v874
    %v882 = vadd.f32 %v869, %v874
    %vm883 = vcmp.gt.f32.partialorder %v875, 0.0
    %vm884 = vcmp.gt.f32.partialorder %v876, 0.0
    %vm885 = vcmp.gt.f32.partialorder %v877, 0.0
    %vm886 = vcmp.gt.f32.partialorder %v878, 0.0
    %vm887 = vcmp.gt.f32.partialorder %v879, 0.0
    %vm888 = vcmp.gt.f32.partialorder %v880, 0.0
    %vm889 = vcmp.gt.f32.partialorder %v881, 0.0
    %vm890 = vcmp.gt.f32.partialorder %v882, 0.0
    %v891 = vmul.f32 %v875, 0.2
    %v892 = vmul.f32 %v876, 0.2
    %v893 = vmul.f32 %v877, 0.2
    %v894 = vmul.f32 %v878, 0.2
    %v895 = vmul.f32 %v879, 0.2
    %v896 = vmul.f32 %v880, 0.2
    %v897 = vmul.f32 %v881, 0.2
    %v898 = vmul.f32 %v882, 0.2
    %v899 = vsel %vm883, %v875, %v891
    %v900 = vsel %vm884, %v876, %v892
    %v901 = vsel %vm885, %v877, %v893
    %v902 = vsel %vm886, %v878, %v894
    %v903 = vsel %vm887, %v879, %v895
    %v904 = vsel %vm888, %v880, %v896
    %v905 = vsel %vm889, %v881, %v897
    %v906 = vsel %vm890, %v882, %v898
    %s907 = scalar_lea.vmem [#allocation5], 16
    %v908 = vld [vmem:[%s907] sm:$0xff]
    %v909 = vld [vmem:[%s907 + $0x8] sm:$0xff]
    %v910 = vunpack.c.0.s8 %v908
    %v911 = vunpack.c.1.s8 %v908
    %v912 = vunpack.c.2.s8 %v908
    %v913 = vunpack.c.3.s8 %v908
    %v914 = vunpack.c.0.s8 %v909
    %v915 = vunpack.c.1.s8 %v909
    %v916 = vunpack.c.2.s8 %v909
    %v917 = vunpack.c.3.s8 %v909
    %v918 = vcvt.s32.f32 %v910
    %v919 = vcvt.s32.f32 %v911
    %v920 = vcvt.s32.f32 %v912
    %v921 = vcvt.s32.f32 %v913
    %v922 = vcvt.s32.f32 %v914
    %v923 = vcvt.s32.f32 %v915
    %v924 = vcvt.s32.f32 %v916
    %v925 = vcvt.s32.f32 %v917
    %vm926 = vcmp.gt.f32.partialorder %v918, 0.0
    %vm927 = vcmp.gt.f32.partialorder %v919, 0.0
    %vm928 = vcmp.gt.f32.partialorder %v920, 0.0
    %vm929 = vcmp.gt.f32.partialorder %v921, 0.0
    %vm930 = vcmp.gt.f32.partialorder %v922, 0.0
    %vm931 = vcmp.gt.f32.partialorder %v923, 0.0
    %vm932 = vcmp.gt.f32.partialorder %v924, 0.0
    %vm933 = vcmp.gt.f32.partialorder %v925, 0.0
    %v934 = vsel %vm926, %v899, -1e+30
    %v935 = vsel %vm927, %v900, -1e+30
    %v936 = vsel %vm928, %v901, -1e+30
    %v937 = vsel %vm929, %v902, -1e+30
    %v938 = vsel %vm930, %v903, -1e+30
    %v939 = vsel %vm931, %v904, -1e+30
    %v940 = vsel %vm932, %v905, -1e+30
    %v941 = vsel %vm933, %v906, -1e+30
    %v942 = vsel %vm617, %v934, -inf
    %943 = vmax.xlane.f32.xlu0 %v942
    %v944 = vpop.xlane.xlu0 %943
    %v945 = vsel %vm617, %v935, -inf
    %946 = vmax.xlane.f32.xlu0 %v945
    %v947 = vpop.xlane.xlu0 %946
    %v948 = vsel %vm617, %v936, -inf
    %949 = vmax.xlane.f32.xlu0 %v948
    %v950 = vpop.xlane.xlu0 %949
    %v951 = vsel %vm617, %v937, -inf
    %952 = vmax.xlane.f32.xlu0 %v951
    %v953 = vpop.xlane.xlu0 %952
    %v954 = vsel %vm617, %v938, -inf
    %955 = vmax.xlane.f32.xlu0 %v954
    %v956 = vpop.xlane.xlu0 %955
    %v957 = vsel %vm617, %v939, -inf
    %958 = vmax.xlane.f32.xlu0 %v957
    %v959 = vpop.xlane.xlu0 %958
    %v960 = vsel %vm617, %v940, -inf
    %961 = vmax.xlane.f32.xlu0 %v960
    %v962 = vpop.xlane.xlu0 %961
    %v963 = vsel %vm617, %v941, -inf
    %964 = vmax.xlane.f32.xlu0 %v963
    %v965 = vpop.xlane.xlu0 %964
    %v966 = vmax.f32 %v642, %v944
    %v967 = vmax.f32 %v643, %v947
    %v968 = vmax.f32 %v644, %v950
    %v969 = vmax.f32 %v645, %v953
    %v970 = vmax.f32 %v646, %v956
    %v971 = vmax.f32 %v647, %v959
    %v972 = vmax.f32 %v648, %v962
    %v973 = vmax.f32 %v649, %v965
    %v974 = vsub.f32 %v642, %v966
    %v975 = vsub.f32 %v643, %v967
    %v976 = vsub.f32 %v644, %v968
    %v977 = vsub.f32 %v645, %v969
    %v978 = vsub.f32 %v646, %v970
    %v979 = vsub.f32 %v647, %v971
    %v980 = vsub.f32 %v648, %v972
    %v981 = vsub.f32 %v649, %v973
    %v982 = vmul.f32 %v974, 1.442695
    %v983 = vpow.pop %v982
    %v984 = vmul.f32 %v975, 1.442695
    %v985 = vpow.pop %v984
    %v986 = vmul.f32 %v976, 1.442695
    %v987 = vpow.pop %v986
    %v988 = vmul.f32 %v977, 1.442695
    %v989 = vpow.pop %v988
    %v990 = vmul.f32 %v978, 1.442695
    %v991 = vpow.pop %v990
    %v992 = vmul.f32 %v979, 1.442695
    %v993 = vpow.pop %v992
    %v994 = vmul.f32 %v980, 1.442695
    %v995 = vpow.pop %v994
    %v996 = vmul.f32 %v981, 1.442695
    %v997 = vpow.pop %v996
    %v998 = vsub.f32 %v934, %v966
    %v999 = vsub.f32 %v935, %v967
    %v1000 = vsub.f32 %v936, %v968
    %v1001 = vsub.f32 %v937, %v969
    %v1002 = vsub.f32 %v938, %v970
    %v1003 = vsub.f32 %v939, %v971
    %v1004 = vsub.f32 %v940, %v972
    %v1005 = vsub.f32 %v941, %v973
    %v1006 = vmul.f32 %v998, 1.442695
    %v1007 = vpow.pop %v1006
    %v1008 = vmul.f32 %v999, 1.442695
    %v1009 = vpow.pop %v1008
    %v1010 = vmul.f32 %v1000, 1.442695
    %v1011 = vpow.pop %v1010
    %v1012 = vmul.f32 %v1001, 1.442695
    %v1013 = vpow.pop %v1012
    %v1014 = vmul.f32 %v1002, 1.442695
    %v1015 = vpow.pop %v1014
    %v1016 = vmul.f32 %v1003, 1.442695
    %v1017 = vpow.pop %v1016
    %v1018 = vmul.f32 %v1004, 1.442695
    %v1019 = vpow.pop %v1018
    %v1020 = vmul.f32 %v1005, 1.442695
    %v1021 = vpow.pop %v1020
    %v1022 = vsel %vm926, %v1007, 0.0
    %v1023 = vsel %vm927, %v1009, 0.0
    %v1024 = vsel %vm928, %v1011, 0.0
    %v1025 = vsel %vm929, %v1013, 0.0
    %v1026 = vsel %vm930, %v1015, 0.0
    %v1027 = vsel %vm931, %v1017, 0.0
    %v1028 = vsel %vm932, %v1019, 0.0
    %v1029 = vsel %vm933, %v1021, 0.0
    %v1030 = vmul.f32 %v983, %v738
    %v1031 = vmul.f32 %v985, %v739
    %v1032 = vmul.f32 %v987, %v740
    %v1033 = vmul.f32 %v989, %v741
    %v1034 = vmul.f32 %v991, %v742
    %v1035 = vmul.f32 %v993, %v743
    %v1036 = vmul.f32 %v995, %v744
    %v1037 = vmul.f32 %v997, %v745
    %v1038 = vsel %vm617, %v1022, 0.0
    %1039 = vadd.xlane.f32.xlu0 %v1038
    %v1040 = vpop.xlane.xlu0 %1039
    %v1041 = vsel %vm617, %v1023, 0.0
    %1042 = vadd.xlane.f32.xlu0 %v1041
    %v1043 = vpop.xlane.xlu0 %1042
    %v1044 = vsel %vm617, %v1024, 0.0
    %1045 = vadd.xlane.f32.xlu0 %v1044
    %v1046 = vpop.xlane.xlu0 %1045
    %v1047 = vsel %vm617, %v1025, 0.0
    %1048 = vadd.xlane.f32.xlu0 %v1047
    %v1049 = vpop.xlane.xlu0 %1048
    %v1050 = vsel %vm617, %v1026, 0.0
    %1051 = vadd.xlane.f32.xlu0 %v1050
    %v1052 = vpop.xlane.xlu0 %1051
    %v1053 = vsel %vm617, %v1027, 0.0
    %1054 = vadd.xlane.f32.xlu0 %v1053
    %v1055 = vpop.xlane.xlu0 %1054
    %v1056 = vsel %vm617, %v1028, 0.0
    %1057 = vadd.xlane.f32.xlu0 %v1056
    %v1058 = vpop.xlane.xlu0 %1057
    %v1059 = vsel %vm617, %v1029, 0.0
    %1060 = vadd.xlane.f32.xlu0 %v1059
    %v1061 = vpop.xlane.xlu0 %1060
    %v1062 = vadd.f32 %v1030, %v1040
    %v1063 = vadd.f32 %v1031, %v1043
    %v1064 = vadd.f32 %v1032, %v1046
    %v1065 = vadd.f32 %v1033, %v1049
    %v1066 = vadd.f32 %v1034, %v1052
    %v1067 = vadd.f32 %v1035, %v1055
    %v1068 = vadd.f32 %v1036, %v1058
    %v1069 = vadd.f32 %v1037, %v1061
    %v1070 = vmul.f32 %v983, %v831
    %v1071 = vmul.f32 %v985, %v832
    %v1072 = vmul.f32 %v987, %v833
    %v1073 = vmul.f32 %v989, %v834
    %v1074 = vmul.f32 %v991, %v835
    %v1075 = vmul.f32 %v993, %v836
    %v1076 = vmul.f32 %v995, %v837
    %v1077 = vmul.f32 %v997, %v838
    %v1078 = vpack.c.bf16 %v1023, %v1022
    %v1079 = vpack.c.bf16 %v1025, %v1024
    %v1080 = vpack.c.bf16 %v1027, %v1026
    %v1081 = vpack.c.bf16 %v1029, %v1028
    %v1082 = vpack.c.bf16 %v220, %v216
    %v1083 = vpack.c.bf16 %v230, %v226
    %v1084 = vpack.c.bf16 %v240, %v236
    %v1085 = vpack.c.bf16 %v250, %v246
    %v1087 = vsel %vm617, %v1078, 0
    %v1090 = vsel %vm617, %v1079, 0
    %v1093 = vsel %vm617, %v1080, 0
    %v1096 = vsel %vm617, %v1081, 0
    %1098 = vmatprep.subr.bf16.mxu0 0
    %1099 = vmatpush1.bf16.msra.mxu0 %v1082
    %1100 = vmatprep.subr.bf16.mxu0 0
    %1101 = vmatpush1.bf16.msra.mxu0 %v1083
    %1102 = vmatprep.subr.bf16.mxu0 0
    %1103 = vmatpush1.bf16.msra.mxu0 %v1084
    %1104 = vmatprep.subr.bf16.mxu0 0
    %1105 = vmatpush1.bf16.msra.mxu0 %v1085
    %1106 = vmatprep.subr.bf16.mxu0 0
    %1107 = vmatpush1.bf16.msra.mxu0 0
    %1108 = vmatprep.subr.bf16.mxu0 0
    %1109 = vmatpush1.bf16.msra.mxu0 0
    %1110 = vmatprep.subr.bf16.mxu0 0
    %1111 = vmatpush1.bf16.msra.mxu0 0
    %1112 = vmatprep.subr.bf16.mxu0 0
    %1113 = vmatpush1.bf16.msra.mxu0 0
    %1114 = vmatprep.subr.bf16.mxu0 0
    %1115 = vmatpush1.bf16.msra.mxu0 0
    %1116 = vmatprep.subr.bf16.mxu0 0
    %1117 = vmatpush1.bf16.msra.mxu0 0
    %1118 = vmatprep.subr.bf16.mxu0 0
    %1119 = vmatpush1.bf16.msra.mxu0 0
    %1120 = vmatprep.subr.bf16.mxu0 0
    %1121 = vmatpush1.bf16.msra.mxu0 0
    %1122 = vmatprep.subr.bf16.mxu0 0
    %1123 = vmatpush1.bf16.msra.mxu0 0
    %1124 = vmatprep.subr.bf16.mxu0 0
    %1125 = vmatpush1.bf16.msra.mxu0 0
    %1126 = vmatprep.subr.bf16.mxu0 0
    %1127 = vmatpush1.bf16.msra.mxu0 0
    %1128 = vmatprep.subr.bf16.mxu0 0
    %1129 = vmatpush1.bf16.msra.mxu0 0
    %1130 = vmatprep.mubr.bf16.mxu0 0
    %1131 = vmatmul.mubr.bf16.gmra.mrb[0].mxu0 %v1087
    %v1132 = vpop.f32.mrb[0].mxu0
    %v1133 = vadd.f32 0.0, %v1132
    %v1134 = vpop.f32.mrb[0].mxu0
    %v1135 = vpop.f32.mrb[0].mxu0
    %v1136 = vadd.f32 0.0, %v1135
    %v1137 = vpop.f32.mrb[0].mxu0
    %1138 = vmatprep.mubr.bf16.mxu0 0
    %1139 = vmatmul.mubr.bf16.gmra.mrb[0].mxu0 %v1090
    %v1140 = vpop.f32.mrb[0].mxu0
    %v1141 = vadd.f32 0.0, %v1140
    %v1142 = vpop.f32.mrb[0].mxu0
    %v1143 = vpop.f32.mrb[0].mxu0
    %v1144 = vadd.f32 0.0, %v1143
    %v1145 = vpop.f32.mrb[0].mxu0
    %1146 = vmatprep.mubr.bf16.mxu0 0
    %1147 = vmatmul.mubr.bf16.gmra.mrb[0].mxu0 %v1093
    %v1148 = vpop.f32.mrb[0].mxu0
    %v1149 = vadd.f32 0.0, %v1148
    %v1150 = vpop.f32.mrb[0].mxu0
    %v1151 = vpop.f32.mrb[0].mxu0
    %v1152 = vadd.f32 0.0, %v1151
    %v1153 = vpop.f32.mrb[0].mxu0
    %1154 = vmatprep.mubr.bf16.mxu0 0
    %1155 = vmatmul.mubr.bf16.gmra.mrb[0].mxu0 %v1096
    %v1156 = vpop.f32.mrb[0].mxu0
    %v1157 = vadd.f32 0.0, %v1156
    %v1158 = vpop.f32.mrb[0].mxu0
    %v1159 = vpop.f32.mrb[0].mxu0
    %v1160 = vadd.f32 0.0, %v1159
    %v1161 = vpop.f32.mrb[0].mxu0
    %1162 = vdwg.mxu0
    %v1163 = vadd.f32 %v1070, %v1133
    %v1164 = vadd.f32 %v1071, %v1136
    %v1165 = vadd.f32 %v1072, %v1141
    %v1166 = vadd.f32 %v1073, %v1144
    %v1167 = vadd.f32 %v1074, %v1149
    %v1168 = vadd.f32 %v1075, %v1152
    %v1169 = vadd.f32 %v1076, %v1157
    %v1170 = vadd.f32 %v1077, %v1160
    %1171 = vset.pattern.permute.xlu0 2
    %1172 = vperm.xlu0 %1171, %v433
    %v1173 = vpop.permute.xlu0 %1172
    %1175 = vset.pattern.permute.xlu0 2
    %1176 = vperm.xlu0 %1175, %v436
    %v1177 = vpop.permute.xlu0 %1176
    %1179 = vset.pattern.permute.xlu0 2
    %1180 = vperm.xlu0 %1179, %v441
    %v1181 = vpop.permute.xlu0 %1180
    %1183 = vset.pattern.permute.xlu0 2
    %1184 = vperm.xlu0 %1183, %v444
    %v1185 = vpop.permute.xlu0 %1184
    %1187 = vset.pattern.permute.xlu0 2
    %1188 = vperm.xlu0 %1187, %v449
    %v1189 = vpop.permute.xlu0 %1188
    %1191 = vset.pattern.permute.xlu0 2
    %1192 = vperm.xlu0 %1191, %v452
    %v1193 = vpop.permute.xlu0 %1192
    %1195 = vset.pattern.permute.xlu0 2
    %1196 = vperm.xlu0 %1195, %v457
    %v1197 = vpop.permute.xlu0 %1196
    %1199 = vset.pattern.permute.xlu0 2
    %1200 = vperm.xlu0 %1199, %v460
    %v1201 = vpop.permute.xlu0 %1200
    %v1203 = vlaneseq
    %v1204 = vshrl.u32 %v1203, 7
    %v1205 = vsub.s32 2, %v1204
    %v1206 = vrot.slane %v502, %v1205
    %v1207 = vadd.f32 %v1173, %v1206
    %v1208 = vadd.f32 %v1177, %v1206
    %v1209 = vadd.f32 %v1181, %v1206
    %v1210 = vadd.f32 %v1185, %v1206
    %v1211 = vadd.f32 %v1189, %v1206
    %v1212 = vadd.f32 %v1193, %v1206
    %v1213 = vadd.f32 %v1197, %v1206
    %v1214 = vadd.f32 %v1201, %v1206
    %vm1215 = vcmp.gt.f32.partialorder %v1207, 0.0
    %vm1216 = vcmp.gt.f32.partialorder %v1208, 0.0
    %vm1217 = vcmp.gt.f32.partialorder %v1209, 0.0
    %vm1218 = vcmp.gt.f32.partialorder %v1210, 0.0
    %vm1219 = vcmp.gt.f32.partialorder %v1211, 0.0
    %vm1220 = vcmp.gt.f32.partialorder %v1212, 0.0
    %vm1221 = vcmp.gt.f32.partialorder %v1213, 0.0
    %vm1222 = vcmp.gt.f32.partialorder %v1214, 0.0
    %v1223 = vmul.f32 %v1207, 0.2
    %v1224 = vmul.f32 %v1208, 0.2
    %v1225 = vmul.f32 %v1209, 0.2
    %v1226 = vmul.f32 %v1210, 0.2
    %v1227 = vmul.f32 %v1211, 0.2
    %v1228 = vmul.f32 %v1212, 0.2
    %v1229 = vmul.f32 %v1213, 0.2
    %v1230 = vmul.f32 %v1214, 0.2
    %v1231 = vsel %vm1215, %v1207, %v1223
    %v1232 = vsel %vm1216, %v1208, %v1224
    %v1233 = vsel %vm1217, %v1209, %v1225
    %v1234 = vsel %vm1218, %v1210, %v1226
    %v1235 = vsel %vm1219, %v1211, %v1227
    %v1236 = vsel %vm1220, %v1212, %v1228
    %v1237 = vsel %vm1221, %v1213, %v1229
    %v1238 = vsel %vm1222, %v1214, %v1230
    %s1239 = scalar_lea.vmem [#allocation5], 32
    %v1240 = vld [vmem:[%s1239] sm:$0xff]
    %v1241 = vld [vmem:[%s1239 + $0x8] sm:$0xff]
    %v1242 = vunpack.c.0.s8 %v1240
    %v1243 = vunpack.c.1.s8 %v1240
    %v1244 = vunpack.c.2.s8 %v1240
    %v1245 = vunpack.c.3.s8 %v1240
    %v1246 = vunpack.c.0.s8 %v1241
    %v1247 = vunpack.c.1.s8 %v1241
    %v1248 = vunpack.c.2.s8 %v1241
    %v1249 = vunpack.c.3.s8 %v1241
    %v1250 = vcvt.s32.f32 %v1242
    %v1251 = vcvt.s32.f32 %v1243
    %v1252 = vcvt.s32.f32 %v1244
    %v1253 = vcvt.s32.f32 %v1245
    %v1254 = vcvt.s32.f32 %v1246
    %v1255 = vcvt.s32.f32 %v1247
    %v1256 = vcvt.s32.f32 %v1248
    %v1257 = vcvt.s32.f32 %v1249
    %vm1258 = vcmp.gt.f32.partialorder %v1250, 0.0
    %vm1259 = vcmp.gt.f32.partialorder %v1251, 0.0
    %vm1260 = vcmp.gt.f32.partialorder %v1252, 0.0
    %vm1261 = vcmp.gt.f32.partialorder %v1253, 0.0
    %vm1262 = vcmp.gt.f32.partialorder %v1254, 0.0
    %vm1263 = vcmp.gt.f32.partialorder %v1255, 0.0
    %vm1264 = vcmp.gt.f32.partialorder %v1256, 0.0
    %vm1265 = vcmp.gt.f32.partialorder %v1257, 0.0
    %v1266 = vsel %vm1258, %v1231, -1e+30
    %v1267 = vsel %vm1259, %v1232, -1e+30
    %v1268 = vsel %vm1260, %v1233, -1e+30
    %v1269 = vsel %vm1261, %v1234, -1e+30
    %v1270 = vsel %vm1262, %v1235, -1e+30
    %v1271 = vsel %vm1263, %v1236, -1e+30
    %v1272 = vsel %vm1264, %v1237, -1e+30
    %v1273 = vsel %vm1265, %v1238, -1e+30
    %v1274 = vsel %vm617, %v1266, -inf
    %1275 = vmax.xlane.f32.xlu0 %v1274
    %v1276 = vpop.xlane.xlu0 %1275
    %v1277 = vsel %vm617, %v1267, -inf
    %1278 = vmax.xlane.f32.xlu0 %v1277
    %v1279 = vpop.xlane.xlu0 %1278
    %v1280 = vsel %vm617, %v1268, -inf
    %1281 = vmax.xlane.f32.xlu0 %v1280
    %v1282 = vpop.xlane.xlu0 %1281
    %v1283 = vsel %vm617, %v1269, -inf
    %1284 = vmax.xlane.f32.xlu0 %v1283
    %v1285 = vpop.xlane.xlu0 %1284
    %v1286 = vsel %vm617, %v1270, -inf
    %1287 = vmax.xlane.f32.xlu0 %v1286
    %v1288 = vpop.xlane.xlu0 %1287
    %v1289 = vsel %vm617, %v1271, -inf
    %1290 = vmax.xlane.f32.xlu0 %v1289
    %v1291 = vpop.xlane.xlu0 %1290
    %v1292 = vsel %vm617, %v1272, -inf
    %1293 = vmax.xlane.f32.xlu0 %v1292
    %v1294 = vpop.xlane.xlu0 %1293
    %v1295 = vsel %vm617, %v1273, -inf
    %1296 = vmax.xlane.f32.xlu0 %v1295
    %v1297 = vpop.xlane.xlu0 %1296
    %v1298 = vmax.f32 %v966, %v1276
    %v1299 = vmax.f32 %v967, %v1279
    %v1300 = vmax.f32 %v968, %v1282
    %v1301 = vmax.f32 %v969, %v1285
    %v1302 = vmax.f32 %v970, %v1288
    %v1303 = vmax.f32 %v971, %v1291
    %v1304 = vmax.f32 %v972, %v1294
    %v1305 = vmax.f32 %v973, %v1297
    %v1306 = vsub.f32 %v966, %v1298
    %v1307 = vsub.f32 %v967, %v1299
    %v1308 = vsub.f32 %v968, %v1300
    %v1309 = vsub.f32 %v969, %v1301
    %v1310 = vsub.f32 %v970, %v1302
    %v1311 = vsub.f32 %v971, %v1303
    %v1312 = vsub.f32 %v972, %v1304
    %v1313 = vsub.f32 %v973, %v1305
    %v1314 = vmul.f32 %v1306, 1.442695
    %v1315 = vpow.pop %v1314
    %v1316 = vmul.f32 %v1307, 1.442695
    %v1317 = vpow.pop %v1316
    %v1318 = vmul.f32 %v1308, 1.442695
    %v1319 = vpow.pop %v1318
    %v1320 = vmul.f32 %v1309, 1.442695
    %v1321 = vpow.pop %v1320
    %v1322 = vmul.f32 %v1310, 1.442695
    %v1323 = vpow.pop %v1322
    %v1324 = vmul.f32 %v1311, 1.442695
    %v1325 = vpow.pop %v1324
    %v1326 = vmul.f32 %v1312, 1.442695
    %v1327 = vpow.pop %v1326
    %v1328 = vmul.f32 %v1313, 1.442695
    %v1329 = vpow.pop %v1328
    %v1330 = vsub.f32 %v1266, %v1298
    %v1331 = vsub.f32 %v1267, %v1299
    %v1332 = vsub.f32 %v1268, %v1300
    %v1333 = vsub.f32 %v1269, %v1301
    %v1334 = vsub.f32 %v1270, %v1302
    %v1335 = vsub.f32 %v1271, %v1303
    %v1336 = vsub.f32 %v1272, %v1304
    %v1337 = vsub.f32 %v1273, %v1305
    %v1338 = vmul.f32 %v1330, 1.442695
    %v1339 = vpow.pop %v1338
    %v1340 = vmul.f32 %v1331, 1.442695
    %v1341 = vpow.pop %v1340
    %v1342 = vmul.f32 %v1332, 1.442695
    %v1343 = vpow.pop %v1342
    %v1344 = vmul.f32 %v1333, 1.442695
    %v1345 = vpow.pop %v1344
    %v1346 = vmul.f32 %v1334, 1.442695
    %v1347 = vpow.pop %v1346
    %v1348 = vmul.f32 %v1335, 1.442695
    %v1349 = vpow.pop %v1348
    %v1350 = vmul.f32 %v1336, 1.442695
    %v1351 = vpow.pop %v1350
    %v1352 = vmul.f32 %v1337, 1.442695
    %v1353 = vpow.pop %v1352
    %v1354 = vsel %vm1258, %v1339, 0.0
    %v1355 = vsel %vm1259, %v1341, 0.0
    %v1356 = vsel %vm1260, %v1343, 0.0
    %v1357 = vsel %vm1261, %v1345, 0.0
    %v1358 = vsel %vm1262, %v1347, 0.0
    %v1359 = vsel %vm1263, %v1349, 0.0
    %v1360 = vsel %vm1264, %v1351, 0.0
    %v1361 = vsel %vm1265, %v1353, 0.0
    %v1362 = vmul.f32 %v1315, %v1062
    %v1363 = vmul.f32 %v1317, %v1063
    %v1364 = vmul.f32 %v1319, %v1064
    %v1365 = vmul.f32 %v1321, %v1065
    %v1366 = vmul.f32 %v1323, %v1066
    %v1367 = vmul.f32 %v1325, %v1067
    %v1368 = vmul.f32 %v1327, %v1068
    %v1369 = vmul.f32 %v1329, %v1069
    %v1370 = vsel %vm617, %v1354, 0.0
    %1371 = vadd.xlane.f32.xlu0 %v1370
    %v1372 = vpop.xlane.xlu0 %1371
    %v1373 = vsel %vm617, %v1355, 0.0
    %1374 = vadd.xlane.f32.xlu0 %v1373
    %v1375 = vpop.xlane.xlu0 %1374
    %v1376 = vsel %vm617, %v1356, 0.0
    %1377 = vadd.xlane.f32.xlu0 %v1376
    %v1378 = vpop.xlane.xlu0 %1377
    %v1379 = vsel %vm617, %v1357, 0.0
    %1380 = vadd.xlane.f32.xlu0 %v1379
    %v1381 = vpop.xlane.xlu0 %1380
    %v1382 = vsel %vm617, %v1358, 0.0
    %1383 = vadd.xlane.f32.xlu0 %v1382
    %v1384 = vpop.xlane.xlu0 %1383
    %v1385 = vsel %vm617, %v1359, 0.0
    %1386 = vadd.xlane.f32.xlu0 %v1385
    %v1387 = vpop.xlane.xlu0 %1386
    %v1388 = vsel %vm617, %v1360, 0.0
    %1389 = vadd.xlane.f32.xlu0 %v1388
    %v1390 = vpop.xlane.xlu0 %1389
    %v1391 = vsel %vm617, %v1361, 0.0
    %1392 = vadd.xlane.f32.xlu0 %v1391
    %v1393 = vpop.xlane.xlu0 %1392
    %v1394 = vadd.f32 %v1362, %v1372
    %v1395 = vadd.f32 %v1363, %v1375
    %v1396 = vadd.f32 %v1364, %v1378
    %v1397 = vadd.f32 %v1365, %v1381
    %v1398 = vadd.f32 %v1366, %v1384
    %v1399 = vadd.f32 %v1367, %v1387
    %v1400 = vadd.f32 %v1368, %v1390
    %v1401 = vadd.f32 %v1369, %v1393
    %v1402 = vmul.f32 %v1315, %v1163
    %v1403 = vmul.f32 %v1317, %v1164
    %v1404 = vmul.f32 %v1319, %v1165
    %v1405 = vmul.f32 %v1321, %v1166
    %v1406 = vmul.f32 %v1323, %v1167
    %v1407 = vmul.f32 %v1325, %v1168
    %v1408 = vmul.f32 %v1327, %v1169
    %v1409 = vmul.f32 %v1329, %v1170
    %v1410 = vpack.c.bf16 %v1355, %v1354
    %v1411 = vpack.c.bf16 %v1357, %v1356
    %v1412 = vpack.c.bf16 %v1359, %v1358
    %v1413 = vpack.c.bf16 %v1361, %v1360
    %v1414 = vpack.c.bf16 %v291, %v287
    %v1415 = vpack.c.bf16 %v301, %v297
    %v1416 = vpack.c.bf16 %v311, %v307
    %v1417 = vpack.c.bf16 %v321, %v317
    %v1419 = vsel %vm617, %v1410, 0
    %v1422 = vsel %vm617, %v1411, 0
    %v1425 = vsel %vm617, %v1412, 0
    %v1428 = vsel %vm617, %v1413, 0
    %1430 = vmatprep.subr.bf16.mxu0 0
    %1431 = vmatpush1.bf16.msra.mxu0 %v1414
    %1432 = vmatprep.subr.bf16.mxu0 0
    %1433 = vmatpush1.bf16.msra.mxu0 %v1415
    %1434 = vmatprep.subr.bf16.mxu0 0
    %1435 = vmatpush1.bf16.msra.mxu0 %v1416
    %1436 = vmatprep.subr.bf16.mxu0 0
    %1437 = vmatpush1.bf16.msra.mxu0 %v1417
    %1438 = vmatprep.subr.bf16.mxu0 0
    %1439 = vmatpush1.bf16.msra.mxu0 0
    %1440 = vmatprep.subr.bf16.mxu0 0
    %1441 = vmatpush1.bf16.msra.mxu0 0
    %1442 = vmatprep.subr.bf16.mxu0 0
    %1443 = vmatpush1.bf16.msra.mxu0 0
    %1444 = vmatprep.subr.bf16.mxu0 0
    %1445 = vmatpush1.bf16.msra.mxu0 0
    %1446 = vmatprep.subr.bf16.mxu0 0
    %1447 = vmatpush1.bf16.msra.mxu0 0
    %1448 = vmatprep.subr.bf16.mxu0 0
    %1449 = vmatpush1.bf16.msra.mxu0 0
    %1450 = vmatprep.subr.bf16.mxu0 0
    %1451 = vmatpush1.bf16.msra.mxu0 0
    %1452 = vmatprep.subr.bf16.mxu0 0
    %1453 = vmatpush1.bf16.msra.mxu0 0
    %1454 = vmatprep.subr.bf16.mxu0 0
    %1455 = vmatpush1.bf16.msra.mxu0 0
    %1456 = vmatprep.subr.bf16.mxu0 0
    %1457 = vmatpush1.bf16.msra.mxu0 0
    %1458 = vmatprep.subr.bf16.mxu0 0
    %1459 = vmatpush1.bf16.msra.mxu0 0
    %1460 = vmatprep.subr.bf16.mxu0 0
    %1461 = vmatpush1.bf16.msra.mxu0 0
    %1462 = vmatprep.mubr.bf16.mxu0 0
    %1463 = vmatmul.mubr.bf16.gmra.mrb[0].mxu0 %v1419
    %v1464 = vpop.f32.mrb[0].mxu0
    %v1465 = vadd.f32 0.0, %v1464
    %v1466 = vpop.f32.mrb[0].mxu0
    %v1467 = vpop.f32.mrb[0].mxu0
    %v1468 = vadd.f32 0.0, %v1467
    %v1469 = vpop.f32.mrb[0].mxu0
    %1470 = vmatprep.mubr.bf16.mxu0 0
    %1471 = vmatmul.mubr.bf16.gmra.mrb[0].mxu0 %v1422
    %v1472 = vpop.f32.mrb[0].mxu0
    %v1473 = vadd.f32 0.0, %v1472
    %v1474 = vpop.f32.mrb[0].mxu0
    %v1475 = vpop.f32.mrb[0].mxu0
    %v1476 = vadd.f32 0.0, %v1475
    %v1477 = vpop.f32.mrb[0].mxu0
    %1478 = vmatprep.mubr.bf16.mxu0 0
    %1479 = vmatmul.mubr.bf16.gmra.mrb[0].mxu0 %v1425
    %v1480 = vpop.f32.mrb[0].mxu0
    %v1481 = vadd.f32 0.0, %v1480
    %v1482 = vpop.f32.mrb[0].mxu0
    %v1483 = vpop.f32.mrb[0].mxu0
    %v1484 = vadd.f32 0.0, %v1483
    %v1485 = vpop.f32.mrb[0].mxu0
    %1486 = vmatprep.mubr.bf16.mxu0 0
    %1487 = vmatmul.mubr.bf16.gmra.mrb[0].mxu0 %v1428
    %v1488 = vpop.f32.mrb[0].mxu0
    %v1489 = vadd.f32 0.0, %v1488
    %v1490 = vpop.f32.mrb[0].mxu0
    %v1491 = vpop.f32.mrb[0].mxu0
    %v1492 = vadd.f32 0.0, %v1491
    %v1493 = vpop.f32.mrb[0].mxu0
    %1494 = vdwg.mxu0
    %v1495 = vadd.f32 %v1402, %v1465
    %v1496 = vadd.f32 %v1403, %v1468
    %v1497 = vadd.f32 %v1404, %v1473
    %v1498 = vadd.f32 %v1405, %v1476
    %v1499 = vadd.f32 %v1406, %v1481
    %v1500 = vadd.f32 %v1407, %v1484
    %v1501 = vadd.f32 %v1408, %v1489
    %v1502 = vadd.f32 %v1409, %v1492
    %1503 = vset.pattern.permute.xlu0 3
    %1504 = vperm.xlu0 %1503, %v433
    %v1505 = vpop.permute.xlu0 %1504
    %1507 = vset.pattern.permute.xlu0 3
    %1508 = vperm.xlu0 %1507, %v436
    %v1509 = vpop.permute.xlu0 %1508
    %1511 = vset.pattern.permute.xlu0 3
    %1512 = vperm.xlu0 %1511, %v441
    %v1513 = vpop.permute.xlu0 %1512
    %1515 = vset.pattern.permute.xlu0 3
    %1516 = vperm.xlu0 %1515, %v444
    %v1517 = vpop.permute.xlu0 %1516
    %1519 = vset.pattern.permute.xlu0 3
    %1520 = vperm.xlu0 %1519, %v449
    %v1521 = vpop.permute.xlu0 %1520
    %1523 = vset.pattern.permute.xlu0 3
    %1524 = vperm.xlu0 %1523, %v452
    %v1525 = vpop.permute.xlu0 %1524
    %1527 = vset.pattern.permute.xlu0 3
    %1528 = vperm.xlu0 %1527, %v457
    %v1529 = vpop.permute.xlu0 %1528
    %1531 = vset.pattern.permute.xlu0 3
    %1532 = vperm.xlu0 %1531, %v460
    %v1533 = vpop.permute.xlu0 %1532
    %v1535 = vlaneseq
    %v1536 = vshrl.u32 %v1535, 7
    %v1537 = vsub.s32 3, %v1536
    %v1538 = vrot.slane %v502, %v1537
    %v1539 = vadd.f32 %v1505, %v1538
    %v1540 = vadd.f32 %v1509, %v1538
    %v1541 = vadd.f32 %v1513, %v1538
    %v1542 = vadd.f32 %v1517, %v1538
    %v1543 = vadd.f32 %v1521, %v1538
    %v1544 = vadd.f32 %v1525, %v1538
    %v1545 = vadd.f32 %v1529, %v1538
    %v1546 = vadd.f32 %v1533, %v1538
    %vm1547 = vcmp.gt.f32.partialorder %v1539, 0.0
    %vm1548 = vcmp.gt.f32.partialorder %v1540, 0.0
    %vm1549 = vcmp.gt.f32.partialorder %v1541, 0.0
    %vm1550 = vcmp.gt.f32.partialorder %v1542, 0.0
    %vm1551 = vcmp.gt.f32.partialorder %v1543, 0.0
    %vm1552 = vcmp.gt.f32.partialorder %v1544, 0.0
    %vm1553 = vcmp.gt.f32.partialorder %v1545, 0.0
    %vm1554 = vcmp.gt.f32.partialorder %v1546, 0.0
    %v1555 = vmul.f32 %v1539, 0.2
    %v1556 = vmul.f32 %v1540, 0.2
    %v1557 = vmul.f32 %v1541, 0.2
    %v1558 = vmul.f32 %v1542, 0.2
    %v1559 = vmul.f32 %v1543, 0.2
    %v1560 = vmul.f32 %v1544, 0.2
    %v1561 = vmul.f32 %v1545, 0.2
    %v1562 = vmul.f32 %v1546, 0.2
    %v1563 = vsel %vm1547, %v1539, %v1555
    %v1564 = vsel %vm1548, %v1540, %v1556
    %v1565 = vsel %vm1549, %v1541, %v1557
    %v1566 = vsel %vm1550, %v1542, %v1558
    %v1567 = vsel %vm1551, %v1543, %v1559
    %v1568 = vsel %vm1552, %v1544, %v1560
    %v1569 = vsel %vm1553, %v1545, %v1561
    %v1570 = vsel %vm1554, %v1546, %v1562
    %s1571 = scalar_lea.vmem [#allocation5], 48
    %v1572 = vld [vmem:[%s1571] sm:$0xff]
    %v1573 = vld [vmem:[%s1571 + $0x8] sm:$0xff]
    %v1574 = vunpack.c.0.s8 %v1572
    %v1575 = vunpack.c.1.s8 %v1572
    %v1576 = vunpack.c.2.s8 %v1572
    %v1577 = vunpack.c.3.s8 %v1572
    %v1578 = vunpack.c.0.s8 %v1573
    %v1579 = vunpack.c.1.s8 %v1573
    %v1580 = vunpack.c.2.s8 %v1573
    %v1581 = vunpack.c.3.s8 %v1573
    %v1582 = vcvt.s32.f32 %v1574
    %v1583 = vcvt.s32.f32 %v1575
    %v1584 = vcvt.s32.f32 %v1576
    %v1585 = vcvt.s32.f32 %v1577
    %v1586 = vcvt.s32.f32 %v1578
    %v1587 = vcvt.s32.f32 %v1579
    %v1588 = vcvt.s32.f32 %v1580
    %v1589 = vcvt.s32.f32 %v1581
    %vm1590 = vcmp.gt.f32.partialorder %v1582, 0.0
    %vm1591 = vcmp.gt.f32.partialorder %v1583, 0.0
    %vm1592 = vcmp.gt.f32.partialorder %v1584, 0.0
    %vm1593 = vcmp.gt.f32.partialorder %v1585, 0.0
    %vm1594 = vcmp.gt.f32.partialorder %v1586, 0.0
    %vm1595 = vcmp.gt.f32.partialorder %v1587, 0.0
    %vm1596 = vcmp.gt.f32.partialorder %v1588, 0.0
    %vm1597 = vcmp.gt.f32.partialorder %v1589, 0.0
    %v1598 = vsel %vm1590, %v1563, -1e+30
    %v1599 = vsel %vm1591, %v1564, -1e+30
    %v1600 = vsel %vm1592, %v1565, -1e+30
    %v1601 = vsel %vm1593, %v1566, -1e+30
    %v1602 = vsel %vm1594, %v1567, -1e+30
    %v1603 = vsel %vm1595, %v1568, -1e+30
    %v1604 = vsel %vm1596, %v1569, -1e+30
    %v1605 = vsel %vm1597, %v1570, -1e+30
    %v1606 = vsel %vm617, %v1598, -inf
    %1607 = vmax.xlane.f32.xlu0 %v1606
    %v1608 = vpop.xlane.xlu0 %1607
    %v1609 = vsel %vm617, %v1599, -inf
    %1610 = vmax.xlane.f32.xlu0 %v1609
    %v1611 = vpop.xlane.xlu0 %1610
    %v1612 = vsel %vm617, %v1600, -inf
    %1613 = vmax.xlane.f32.xlu0 %v1612
    %v1614 = vpop.xlane.xlu0 %1613
    %v1615 = vsel %vm617, %v1601, -inf
    %1616 = vmax.xlane.f32.xlu0 %v1615
    %v1617 = vpop.xlane.xlu0 %1616
    %v1618 = vsel %vm617, %v1602, -inf
    %1619 = vmax.xlane.f32.xlu0 %v1618
    %v1620 = vpop.xlane.xlu0 %1619
    %v1621 = vsel %vm617, %v1603, -inf
    %1622 = vmax.xlane.f32.xlu0 %v1621
    %v1623 = vpop.xlane.xlu0 %1622
    %v1624 = vsel %vm617, %v1604, -inf
    %1625 = vmax.xlane.f32.xlu0 %v1624
    %v1626 = vpop.xlane.xlu0 %1625
    %v1627 = vsel %vm617, %v1605, -inf
    %1628 = vmax.xlane.f32.xlu0 %v1627
    %v1629 = vpop.xlane.xlu0 %1628
    %v1630 = vmax.f32 %v1298, %v1608
    %v1631 = vmax.f32 %v1299, %v1611
    %v1632 = vmax.f32 %v1300, %v1614
    %v1633 = vmax.f32 %v1301, %v1617
    %v1634 = vmax.f32 %v1302, %v1620
    %v1635 = vmax.f32 %v1303, %v1623
    %v1636 = vmax.f32 %v1304, %v1626
    %v1637 = vmax.f32 %v1305, %v1629
    %v1638 = vsub.f32 %v1298, %v1630
    %v1639 = vsub.f32 %v1299, %v1631
    %v1640 = vsub.f32 %v1300, %v1632
    %v1641 = vsub.f32 %v1301, %v1633
    %v1642 = vsub.f32 %v1302, %v1634
    %v1643 = vsub.f32 %v1303, %v1635
    %v1644 = vsub.f32 %v1304, %v1636
    %v1645 = vsub.f32 %v1305, %v1637
    %v1646 = vmul.f32 %v1638, 1.442695
    %v1647 = vpow.pop %v1646
    %v1648 = vmul.f32 %v1639, 1.442695
    %v1649 = vpow.pop %v1648
    %v1650 = vmul.f32 %v1640, 1.442695
    %v1651 = vpow.pop %v1650
    %v1652 = vmul.f32 %v1641, 1.442695
    %v1653 = vpow.pop %v1652
    %v1654 = vmul.f32 %v1642, 1.442695
    %v1655 = vpow.pop %v1654
    %v1656 = vmul.f32 %v1643, 1.442695
    %v1657 = vpow.pop %v1656
    %v1658 = vmul.f32 %v1644, 1.442695
    %v1659 = vpow.pop %v1658
    %v1660 = vmul.f32 %v1645, 1.442695
    %v1661 = vpow.pop %v1660
    %v1662 = vsub.f32 %v1598, %v1630
    %v1663 = vsub.f32 %v1599, %v1631
    %v1664 = vsub.f32 %v1600, %v1632
    %v1665 = vsub.f32 %v1601, %v1633
    %v1666 = vsub.f32 %v1602, %v1634
    %v1667 = vsub.f32 %v1603, %v1635
    %v1668 = vsub.f32 %v1604, %v1636
    %v1669 = vsub.f32 %v1605, %v1637
    %v1670 = vmul.f32 %v1662, 1.442695
    %v1671 = vpow.pop %v1670
    %v1672 = vmul.f32 %v1663, 1.442695
    %v1673 = vpow.pop %v1672
    %v1674 = vmul.f32 %v1664, 1.442695
    %v1675 = vpow.pop %v1674
    %v1676 = vmul.f32 %v1665, 1.442695
    %v1677 = vpow.pop %v1676
    %v1678 = vmul.f32 %v1666, 1.442695
    %v1679 = vpow.pop %v1678
    %v1680 = vmul.f32 %v1667, 1.442695
    %v1681 = vpow.pop %v1680
    %v1682 = vmul.f32 %v1668, 1.442695
    %v1683 = vpow.pop %v1682
    %v1684 = vmul.f32 %v1669, 1.442695
    %v1685 = vpow.pop %v1684
    %v1686 = vsel %vm1590, %v1671, 0.0
    %v1687 = vsel %vm1591, %v1673, 0.0
    %v1688 = vsel %vm1592, %v1675, 0.0
    %v1689 = vsel %vm1593, %v1677, 0.0
    %v1690 = vsel %vm1594, %v1679, 0.0
    %v1691 = vsel %vm1595, %v1681, 0.0
    %v1692 = vsel %vm1596, %v1683, 0.0
    %v1693 = vsel %vm1597, %v1685, 0.0
    %v1694 = vmul.f32 %v1647, %v1394
    %v1695 = vmul.f32 %v1649, %v1395
    %v1696 = vmul.f32 %v1651, %v1396
    %v1697 = vmul.f32 %v1653, %v1397
    %v1698 = vmul.f32 %v1655, %v1398
    %v1699 = vmul.f32 %v1657, %v1399
    %v1700 = vmul.f32 %v1659, %v1400
    %v1701 = vmul.f32 %v1661, %v1401
    %v1702 = vsel %vm617, %v1686, 0.0
    %1703 = vadd.xlane.f32.xlu0 %v1702
    %v1704 = vpop.xlane.xlu0 %1703
    %v1705 = vsel %vm617, %v1687, 0.0
    %1706 = vadd.xlane.f32.xlu0 %v1705
    %v1707 = vpop.xlane.xlu0 %1706
    %v1708 = vsel %vm617, %v1688, 0.0
    %1709 = vadd.xlane.f32.xlu0 %v1708
    %v1710 = vpop.xlane.xlu0 %1709
    %v1711 = vsel %vm617, %v1689, 0.0
    %1712 = vadd.xlane.f32.xlu0 %v1711
    %v1713 = vpop.xlane.xlu0 %1712
    %v1714 = vsel %vm617, %v1690, 0.0
    %1715 = vadd.xlane.f32.xlu0 %v1714
    %v1716 = vpop.xlane.xlu0 %1715
    %v1717 = vsel %vm617, %v1691, 0.0
    %1718 = vadd.xlane.f32.xlu0 %v1717
    %v1719 = vpop.xlane.xlu0 %1718
    %v1720 = vsel %vm617, %v1692, 0.0
    %1721 = vadd.xlane.f32.xlu0 %v1720
    %v1722 = vpop.xlane.xlu0 %1721
    %v1723 = vsel %vm617, %v1693, 0.0
    %1724 = vadd.xlane.f32.xlu0 %v1723
    %v1725 = vpop.xlane.xlu0 %1724
    %v1726 = vadd.f32 %v1694, %v1704
    %v1727 = vadd.f32 %v1695, %v1707
    %v1728 = vadd.f32 %v1696, %v1710
    %v1729 = vadd.f32 %v1697, %v1713
    %v1730 = vadd.f32 %v1698, %v1716
    %v1731 = vadd.f32 %v1699, %v1719
    %v1732 = vadd.f32 %v1700, %v1722
    %v1733 = vadd.f32 %v1701, %v1725
    %v1734 = vmul.f32 %v1647, %v1495
    %v1735 = vmul.f32 %v1649, %v1496
    %v1736 = vmul.f32 %v1651, %v1497
    %v1737 = vmul.f32 %v1653, %v1498
    %v1738 = vmul.f32 %v1655, %v1499
    %v1739 = vmul.f32 %v1657, %v1500
    %v1740 = vmul.f32 %v1659, %v1501
    %v1741 = vmul.f32 %v1661, %v1502
    %v1742 = vpack.c.bf16 %v1687, %v1686
    %v1743 = vpack.c.bf16 %v1689, %v1688
    %v1744 = vpack.c.bf16 %v1691, %v1690
    %v1745 = vpack.c.bf16 %v1693, %v1692
    %v1746 = vpack.c.bf16 %v293, %v289
    %v1747 = vpack.c.bf16 %v303, %v299
    %v1748 = vpack.c.bf16 %v313, %v309
    %v1749 = vpack.c.bf16 %v323, %v319
    %v1751 = vsel %vm617, %v1742, 0
    %v1754 = vsel %vm617, %v1743, 0
    %v1757 = vsel %vm617, %v1744, 0
    %v1760 = vsel %vm617, %v1745, 0
    %1762 = vmatprep.subr.bf16.mxu0 0
    %1763 = vmatpush1.bf16.msra.mxu0 %v1746
    %1764 = vmatprep.subr.bf16.mxu0 0
    %1765 = vmatpush1.bf16.msra.mxu0 %v1747
    %1766 = vmatprep.subr.bf16.mxu0 0
    %1767 = vmatpush1.bf16.msra.mxu0 %v1748
    %1768 = vmatprep.subr.bf16.mxu0 0
    %1769 = vmatpush1.bf16.msra.mxu0 %v1749
    %1770 = vmatprep.subr.bf16.mxu0 0
    %1771 = vmatpush1.bf16.msra.mxu0 0
    %1772 = vmatprep.subr.bf16.mxu0 0
    %1773 = vmatpush1.bf16.msra.mxu0 0
    %1774 = vmatprep.subr.bf16.mxu0 0
    %1775 = vmatpush1.bf16.msra.mxu0 0
    %1776 = vmatprep.subr.bf16.mxu0 0
    %1777 = vmatpush1.bf16.msra.mxu0 0
    %1778 = vmatprep.subr.bf16.mxu0 0
    %1779 = vmatpush1.bf16.msra.mxu0 0
    %1780 = vmatprep.subr.bf16.mxu0 0
    %1781 = vmatpush1.bf16.msra.mxu0 0
    %1782 = vmatprep.subr.bf16.mxu0 0
    %1783 = vmatpush1.bf16.msra.mxu0 0
    %1784 = vmatprep.subr.bf16.mxu0 0
    %1785 = vmatpush1.bf16.msra.mxu0 0
    %1786 = vmatprep.subr.bf16.mxu0 0
    %1787 = vmatpush1.bf16.msra.mxu0 0
    %1788 = vmatprep.subr.bf16.mxu0 0
    %1789 = vmatpush1.bf16.msra.mxu0 0
    %1790 = vmatprep.subr.bf16.mxu0 0
    %1791 = vmatpush1.bf16.msra.mxu0 0
    %1792 = vmatprep.subr.bf16.mxu0 0
    %1793 = vmatpush1.bf16.msra.mxu0 0
    %1794 = vmatprep.mubr.bf16.mxu0 0
    %1795 = vmatmul.mubr.bf16.gmra.mrb[0].mxu0 %v1751
    %v1796 = vpop.f32.mrb[0].mxu0
    %v1797 = vadd.f32 0.0, %v1796
    %v1798 = vpop.f32.mrb[0].mxu0
    %v1799 = vpop.f32.mrb[0].mxu0
    %v1800 = vadd.f32 0.0, %v1799
    %v1801 = vpop.f32.mrb[0].mxu0
    %1802 = vmatprep.mubr.bf16.mxu0 0
    %1803 = vmatmul.mubr.bf16.gmra.mrb[0].mxu0 %v1754
    %v1804 = vpop.f32.mrb[0].mxu0
    %v1805 = vadd.f32 0.0, %v1804
    %v1806 = vpop.f32.mrb[0].mxu0
    %v1807 = vpop.f32.mrb[0].mxu0
    %v1808 = vadd.f32 0.0, %v1807
    %v1809 = vpop.f32.mrb[0].mxu0
    %1810 = vmatprep.mubr.bf16.mxu0 0
    %1811 = vmatmul.mubr.bf16.gmra.mrb[0].mxu0 %v1757
    %v1812 = vpop.f32.mrb[0].mxu0
    %v1813 = vadd.f32 0.0, %v1812
    %v1814 = vpop.f32.mrb[0].mxu0
    %v1815 = vpop.f32.mrb[0].mxu0
    %v1816 = vadd.f32 0.0, %v1815
    %v1817 = vpop.f32.mrb[0].mxu0
    %1818 = vmatprep.mubr.bf16.mxu0 0
    %1819 = vmatmul.mubr.bf16.gmra.mrb[0].mxu0 %v1760
    %v1820 = vpop.f32.mrb[0].mxu0
    %v1821 = vadd.f32 0.0, %v1820
    %v1822 = vpop.f32.mrb[0].mxu0
    %v1823 = vpop.f32.mrb[0].mxu0
    %v1824 = vadd.f32 0.0, %v1823
    %v1825 = vpop.f32.mrb[0].mxu0
    %1826 = vdwg.mxu0
    %v1827 = vadd.f32 %v1734, %v1797
    %v1828 = vadd.f32 %v1735, %v1800
    %v1829 = vadd.f32 %v1736, %v1805
    %v1830 = vadd.f32 %v1737, %v1808
    %v1831 = vadd.f32 %v1738, %v1813
    %v1832 = vadd.f32 %v1739, %v1816
    %v1833 = vadd.f32 %v1740, %v1821
    %v1834 = vadd.f32 %v1741, %v1824
    %1835 = vset.pattern.permute.xlu0 4
    %1836 = vperm.xlu0 %1835, %v433
    %v1837 = vpop.permute.xlu0 %1836
    %1839 = vset.pattern.permute.xlu0 4
    %1840 = vperm.xlu0 %1839, %v436
    %v1841 = vpop.permute.xlu0 %1840
    %1843 = vset.pattern.permute.xlu0 4
    %1844 = vperm.xlu0 %1843, %v441
    %v1845 = vpop.permute.xlu0 %1844
    %1847 = vset.pattern.permute.xlu0 4
    %1848 = vperm.xlu0 %1847, %v444
    %v1849 = vpop.permute.xlu0 %1848
    %1851 = vset.pattern.permute.xlu0 4
    %1852 = vperm.xlu0 %1851, %v449
    %v1853 = vpop.permute.xlu0 %1852
    %1855 = vset.pattern.permute.xlu0 4
    %1856 = vperm.xlu0 %1855, %v452
    %v1857 = vpop.permute.xlu0 %1856
    %1859 = vset.pattern.permute.xlu0 4
    %1860 = vperm.xlu0 %1859, %v457
    %v1861 = vpop.permute.xlu0 %1860
    %1863 = vset.pattern.permute.xlu0 4
    %1864 = vperm.xlu0 %1863, %v460
    %v1865 = vpop.permute.xlu0 %1864
    %v1867 = vlaneseq
    %v1868 = vshrl.u32 %v1867, 7
    %v1869 = vsub.s32 4, %v1868
    %v1870 = vrot.slane %v502, %v1869
    %v1871 = vadd.f32 %v1837, %v1870
    %v1872 = vadd.f32 %v1841, %v1870
    %v1873 = vadd.f32 %v1845, %v1870
    %v1874 = vadd.f32 %v1849, %v1870
    %v1875 = vadd.f32 %v1853, %v1870
    %v1876 = vadd.f32 %v1857, %v1870
    %v1877 = vadd.f32 %v1861, %v1870
    %v1878 = vadd.f32 %v1865, %v1870
    %vm1879 = vcmp.gt.f32.partialorder %v1871, 0.0
    %vm1880 = vcmp.gt.f32.partialorder %v1872, 0.0
    %vm1881 = vcmp.gt.f32.partialorder %v1873, 0.0
    %vm1882 = vcmp.gt.f32.partialorder %v1874, 0.0
    %vm1883 = vcmp.gt.f32.partialorder %v1875, 0.0
    %vm1884 = vcmp.gt.f32.partialorder %v1876, 0.0
    %vm1885 = vcmp.gt.f32.partialorder %v1877, 0.0
    %vm1886 = vcmp.gt.f32.partialorder %v1878, 0.0
    %v1887 = vmul.f32 %v1871, 0.2
    %v1888 = vmul.f32 %v1872, 0.2
    %v1889 = vmul.f32 %v1873, 0.2
    %v1890 = vmul.f32 %v1874, 0.2
    %v1891 = vmul.f32 %v1875, 0.2
    %v1892 = vmul.f32 %v1876, 0.2
    %v1893 = vmul.f32 %v1877, 0.2
    %v1894 = vmul.f32 %v1878, 0.2
    %v1895 = vsel %vm1879, %v1871, %v1887
    %v1896 = vsel %vm1880, %v1872, %v1888
    %v1897 = vsel %vm1881, %v1873, %v1889
    %v1898 = vsel %vm1882, %v1874, %v1890
    %v1899 = vsel %vm1883, %v1875, %v1891
    %v1900 = vsel %vm1884, %v1876, %v1892
    %v1901 = vsel %vm1885, %v1877, %v1893
    %v1902 = vsel %vm1886, %v1878, %v1894
    %s1903 = scalar_lea.vmem [#allocation5], 64
    %v1904 = vld [vmem:[%s1903] sm:$0xff]
    %v1905 = vld [vmem:[%s1903 + $0x8] sm:$0xff]
    %v1906 = vunpack.c.0.s8 %v1904
    %v1907 = vunpack.c.1.s8 %v1904
    %v1908 = vunpack.c.2.s8 %v1904
    %v1909 = vunpack.c.3.s8 %v1904
    %v1910 = vunpack.c.0.s8 %v1905
    %v1911 = vunpack.c.1.s8 %v1905
    %v1912 = vunpack.c.2.s8 %v1905
    %v1913 = vunpack.c.3.s8 %v1905
    %v1914 = vcvt.s32.f32 %v1906
    %v1915 = vcvt.s32.f32 %v1907
    %v1916 = vcvt.s32.f32 %v1908
    %v1917 = vcvt.s32.f32 %v1909
    %v1918 = vcvt.s32.f32 %v1910
    %v1919 = vcvt.s32.f32 %v1911
    %v1920 = vcvt.s32.f32 %v1912
    %v1921 = vcvt.s32.f32 %v1913
    %vm1922 = vcmp.gt.f32.partialorder %v1914, 0.0
    %vm1923 = vcmp.gt.f32.partialorder %v1915, 0.0
    %vm1924 = vcmp.gt.f32.partialorder %v1916, 0.0
    %vm1925 = vcmp.gt.f32.partialorder %v1917, 0.0
    %vm1926 = vcmp.gt.f32.partialorder %v1918, 0.0
    %vm1927 = vcmp.gt.f32.partialorder %v1919, 0.0
    %vm1928 = vcmp.gt.f32.partialorder %v1920, 0.0
    %vm1929 = vcmp.gt.f32.partialorder %v1921, 0.0
    %v1930 = vsel %vm1922, %v1895, -1e+30
    %v1931 = vsel %vm1923, %v1896, -1e+30
    %v1932 = vsel %vm1924, %v1897, -1e+30
    %v1933 = vsel %vm1925, %v1898, -1e+30
    %v1934 = vsel %vm1926, %v1899, -1e+30
    %v1935 = vsel %vm1927, %v1900, -1e+30
    %v1936 = vsel %vm1928, %v1901, -1e+30
    %v1937 = vsel %vm1929, %v1902, -1e+30
    %v1938 = vsel %vm617, %v1930, -inf
    %1939 = vmax.xlane.f32.xlu0 %v1938
    %v1940 = vpop.xlane.xlu0 %1939
    %v1941 = vsel %vm617, %v1931, -inf
    %1942 = vmax.xlane.f32.xlu0 %v1941
    %v1943 = vpop.xlane.xlu0 %1942
    %v1944 = vsel %vm617, %v1932, -inf
    %1945 = vmax.xlane.f32.xlu0 %v1944
    %v1946 = vpop.xlane.xlu0 %1945
    %v1947 = vsel %vm617, %v1933, -inf
    %1948 = vmax.xlane.f32.xlu0 %v1947
    %v1949 = vpop.xlane.xlu0 %1948
    %v1950 = vsel %vm617, %v1934, -inf
    %1951 = vmax.xlane.f32.xlu0 %v1950
    %v1952 = vpop.xlane.xlu0 %1951
    %v1953 = vsel %vm617, %v1935, -inf
    %1954 = vmax.xlane.f32.xlu0 %v1953
    %v1955 = vpop.xlane.xlu0 %1954
    %v1956 = vsel %vm617, %v1936, -inf
    %1957 = vmax.xlane.f32.xlu0 %v1956
    %v1958 = vpop.xlane.xlu0 %1957
    %v1959 = vsel %vm617, %v1937, -inf
    %1960 = vmax.xlane.f32.xlu0 %v1959
    %v1961 = vpop.xlane.xlu0 %1960
    %v1962 = vmax.f32 %v1630, %v1940
    %v1963 = vmax.f32 %v1631, %v1943
    %v1964 = vmax.f32 %v1632, %v1946
    %v1965 = vmax.f32 %v1633, %v1949
    %v1966 = vmax.f32 %v1634, %v1952
    %v1967 = vmax.f32 %v1635, %v1955
    %v1968 = vmax.f32 %v1636, %v1958
    %v1969 = vmax.f32 %v1637, %v1961
    %v1970 = vsub.f32 %v1630, %v1962
    %v1971 = vsub.f32 %v1631, %v1963
    %v1972 = vsub.f32 %v1632, %v1964
    %v1973 = vsub.f32 %v1633, %v1965
    %v1974 = vsub.f32 %v1634, %v1966
    %v1975 = vsub.f32 %v1635, %v1967
    %v1976 = vsub.f32 %v1636, %v1968
    %v1977 = vsub.f32 %v1637, %v1969
    %v1978 = vmul.f32 %v1970, 1.442695
    %v1979 = vpow.pop %v1978
    %v1980 = vmul.f32 %v1971, 1.442695
    %v1981 = vpow.pop %v1980
    %v1982 = vmul.f32 %v1972, 1.442695
    %v1983 = vpow.pop %v1982
    %v1984 = vmul.f32 %v1973, 1.442695
    %v1985 = vpow.pop %v1984
    %v1986 = vmul.f32 %v1974, 1.442695
    %v1987 = vpow.pop %v1986
    %v1988 = vmul.f32 %v1975, 1.442695
    %v1989 = vpow.pop %v1988
    %v1990 = vmul.f32 %v1976, 1.442695
    %v1991 = vpow.pop %v1990
    %v1992 = vmul.f32 %v1977, 1.442695
    %v1993 = vpow.pop %v1992
    %v1994 = vsub.f32 %v1930, %v1962
    %v1995 = vsub.f32 %v1931, %v1963
    %v1996 = vsub.f32 %v1932, %v1964
    %v1997 = vsub.f32 %v1933, %v1965
    %v1998 = vsub.f32 %v1934, %v1966
    %v1999 = vsub.f32 %v1935, %v1967
    %v2000 = vsub.f32 %v1936, %v1968
    %v2001 = vsub.f32 %v1937, %v1969
    %v2002 = vmul.f32 %v1994, 1.442695
    %v2003 = vpow.pop %v2002
    %v2004 = vmul.f32 %v1995, 1.442695
    %v2005 = vpow.pop %v2004
    %v2006 = vmul.f32 %v1996, 1.442695
    %v2007 = vpow.pop %v2006
    %v2008 = vmul.f32 %v1997, 1.442695
    %v2009 = vpow.pop %v2008
    %v2010 = vmul.f32 %v1998, 1.442695
    %v2011 = vpow.pop %v2010
    %v2012 = vmul.f32 %v1999, 1.442695
    %v2013 = vpow.pop %v2012
    %v2014 = vmul.f32 %v2000, 1.442695
    %v2015 = vpow.pop %v2014
    %v2016 = vmul.f32 %v2001, 1.442695
    %v2017 = vpow.pop %v2016
    %v2018 = vsel %vm1922, %v2003, 0.0
    %v2019 = vsel %vm1923, %v2005, 0.0
    %v2020 = vsel %vm1924, %v2007, 0.0
    %v2021 = vsel %vm1925, %v2009, 0.0
    %v2022 = vsel %vm1926, %v2011, 0.0
    %v2023 = vsel %vm1927, %v2013, 0.0
    %v2024 = vsel %vm1928, %v2015, 0.0
    %v2025 = vsel %vm1929, %v2017, 0.0
    %v2026 = vmul.f32 %v1979, %v1726
    %v2027 = vmul.f32 %v1981, %v1727
    %v2028 = vmul.f32 %v1983, %v1728
    %v2029 = vmul.f32 %v1985, %v1729
    %v2030 = vmul.f32 %v1987, %v1730
    %v2031 = vmul.f32 %v1989, %v1731
    %v2032 = vmul.f32 %v1991, %v1732
    %v2033 = vmul.f32 %v1993, %v1733
    %v2034 = vsel %vm617, %v2018, 0.0
    %2035 = vadd.xlane.f32.xlu0 %v2034
    %v2036 = vpop.xlane.xlu0 %2035
    %v2037 = vsel %vm617, %v2019, 0.0
    %2038 = vadd.xlane.f32.xlu0 %v2037
    %v2039 = vpop.xlane.xlu0 %2038
    %v2040 = vsel %vm617, %v2020, 0.0
    %2041 = vadd.xlane.f32.xlu0 %v2040
    %v2042 = vpop.xlane.xlu0 %2041
    %v2043 = vsel %vm617, %v2021, 0.0
    %2044 = vadd.xlane.f32.xlu0 %v2043
    %v2045 = vpop.xlane.xlu0 %2044
    %v2046 = vsel %vm617, %v2022, 0.0
    %2047 = vadd.xlane.f32.xlu0 %v2046
    %v2048 = vpop.xlane.xlu0 %2047
    %v2049 = vsel %vm617, %v2023, 0.0
    %2050 = vadd.xlane.f32.xlu0 %v2049
    %v2051 = vpop.xlane.xlu0 %2050
    %v2052 = vsel %vm617, %v2024, 0.0
    %2053 = vadd.xlane.f32.xlu0 %v2052
    %v2054 = vpop.xlane.xlu0 %2053
    %v2055 = vsel %vm617, %v2025, 0.0
    %2056 = vadd.xlane.f32.xlu0 %v2055
    %v2057 = vpop.xlane.xlu0 %2056
    %v2058 = vadd.f32 %v2026, %v2036
    %v2059 = vadd.f32 %v2027, %v2039
    %v2060 = vadd.f32 %v2028, %v2042
    %v2061 = vadd.f32 %v2029, %v2045
    %v2062 = vadd.f32 %v2030, %v2048
    %v2063 = vadd.f32 %v2031, %v2051
    %v2064 = vadd.f32 %v2032, %v2054
    %v2065 = vadd.f32 %v2033, %v2057
    %v2066 = vmul.f32 %v1979, %v1827
    %v2067 = vmul.f32 %v1981, %v1828
    %v2068 = vmul.f32 %v1983, %v1829
    %v2069 = vmul.f32 %v1985, %v1830
    %v2070 = vmul.f32 %v1987, %v1831
    %v2071 = vmul.f32 %v1989, %v1832
    %v2072 = vmul.f32 %v1991, %v1833
    %v2073 = vmul.f32 %v1993, %v1834
    %v2074 = vpack.c.bf16 %v2019, %v2018
    %v2075 = vpack.c.bf16 %v2021, %v2020
    %v2076 = vpack.c.bf16 %v2023, %v2022
    %v2077 = vpack.c.bf16 %v2025, %v2024
    %v2078 = vpack.c.bf16 %v364, %v360
    %v2079 = vpack.c.bf16 %v374, %v370
    %v2080 = vpack.c.bf16 %v384, %v380
    %v2081 = vpack.c.bf16 %v394, %v390
    %v2083 = vsel %vm617, %v2074, 0
    %v2086 = vsel %vm617, %v2075, 0
    %v2089 = vsel %vm617, %v2076, 0
    %v2092 = vsel %vm617, %v2077, 0
    %2094 = vmatprep.subr.bf16.mxu0 0
    %2095 = vmatpush1.bf16.msra.mxu0 %v2078
    %2096 = vmatprep.subr.bf16.mxu0 0
    %2097 = vmatpush1.bf16.msra.mxu0 %v2079
    %2098 = vmatprep.subr.bf16.mxu0 0
    %2099 = vmatpush1.bf16.msra.mxu0 %v2080
    %2100 = vmatprep.subr.bf16.mxu0 0
    %2101 = vmatpush1.bf16.msra.mxu0 %v2081
    %2102 = vmatprep.subr.bf16.mxu0 0
    %2103 = vmatpush1.bf16.msra.mxu0 0
    %2104 = vmatprep.subr.bf16.mxu0 0
    %2105 = vmatpush1.bf16.msra.mxu0 0
    %2106 = vmatprep.subr.bf16.mxu0 0
    %2107 = vmatpush1.bf16.msra.mxu0 0
    %2108 = vmatprep.subr.bf16.mxu0 0
    %2109 = vmatpush1.bf16.msra.mxu0 0
    %2110 = vmatprep.subr.bf16.mxu0 0
    %2111 = vmatpush1.bf16.msra.mxu0 0
    %2112 = vmatprep.subr.bf16.mxu0 0
    %2113 = vmatpush1.bf16.msra.mxu0 0
    %2114 = vmatprep.subr.bf16.mxu0 0
    %2115 = vmatpush1.bf16.msra.mxu0 0
    %2116 = vmatprep.subr.bf16.mxu0 0
    %2117 = vmatpush1.bf16.msra.mxu0 0
    %2118 = vmatprep.subr.bf16.mxu0 0
    %2119 = vmatpush1.bf16.msra.mxu0 0
    %2120 = vmatprep.subr.bf16.mxu0 0
    %2121 = vmatpush1.bf16.msra.mxu0 0
    %2122 = vmatprep.subr.bf16.mxu0 0
    %2123 = vmatpush1.bf16.msra.mxu0 0
    %2124 = vmatprep.subr.bf16.mxu0 0
    %2125 = vmatpush1.bf16.msra.mxu0 0
    %2126 = vmatprep.mubr.bf16.mxu0 0
    %2127 = vmatmul.mubr.bf16.gmra.mrb[0].mxu0 %v2083
    %v2128 = vpop.f32.mrb[0].mxu0
    %v2129 = vadd.f32 0.0, %v2128
    %v2130 = vpop.f32.mrb[0].mxu0
    %v2131 = vpop.f32.mrb[0].mxu0
    %v2132 = vadd.f32 0.0, %v2131
    %v2133 = vpop.f32.mrb[0].mxu0
    %2134 = vmatprep.mubr.bf16.mxu0 0
    %2135 = vmatmul.mubr.bf16.gmra.mrb[0].mxu0 %v2086
    %v2136 = vpop.f32.mrb[0].mxu0
    %v2137 = vadd.f32 0.0, %v2136
    %v2138 = vpop.f32.mrb[0].mxu0
    %v2139 = vpop.f32.mrb[0].mxu0
    %v2140 = vadd.f32 0.0, %v2139
    %v2141 = vpop.f32.mrb[0].mxu0
    %2142 = vmatprep.mubr.bf16.mxu0 0
    %2143 = vmatmul.mubr.bf16.gmra.mrb[0].mxu0 %v2089
    %v2144 = vpop.f32.mrb[0].mxu0
    %v2145 = vadd.f32 0.0, %v2144
    %v2146 = vpop.f32.mrb[0].mxu0
    %v2147 = vpop.f32.mrb[0].mxu0
    %v2148 = vadd.f32 0.0, %v2147
    %v2149 = vpop.f32.mrb[0].mxu0
    %2150 = vmatprep.mubr.bf16.mxu0 0
    %2151 = vmatmul.mubr.bf16.gmra.mrb[0].mxu0 %v2092
    %v2152 = vpop.f32.mrb[0].mxu0
    %v2153 = vadd.f32 0.0, %v2152
    %v2154 = vpop.f32.mrb[0].mxu0
    %v2155 = vpop.f32.mrb[0].mxu0
    %v2156 = vadd.f32 0.0, %v2155
    %v2157 = vpop.f32.mrb[0].mxu0
    %2158 = vdwg.mxu0
    %v2159 = vadd.f32 %v2066, %v2129
    %v2160 = vadd.f32 %v2067, %v2132
    %v2161 = vadd.f32 %v2068, %v2137
    %v2162 = vadd.f32 %v2069, %v2140
    %v2163 = vadd.f32 %v2070, %v2145
    %v2164 = vadd.f32 %v2071, %v2148
    %v2165 = vadd.f32 %v2072, %v2153
    %v2166 = vadd.f32 %v2073, %v2156
    %2167 = vset.pattern.permute.xlu0 5
    %2168 = vperm.xlu0 %2167, %v433
    %v2169 = vpop.permute.xlu0 %2168
    %2171 = vset.pattern.permute.xlu0 5
    %2172 = vperm.xlu0 %2171, %v436
    %v2173 = vpop.permute.xlu0 %2172
    %2175 = vset.pattern.permute.xlu0 5
    %2176 = vperm.xlu0 %2175, %v441
    %v2177 = vpop.permute.xlu0 %2176
    %2179 = vset.pattern.permute.xlu0 5
    %2180 = vperm.xlu0 %2179, %v444
    %v2181 = vpop.permute.xlu0 %2180
    %2183 = vset.pattern.permute.xlu0 5
    %2184 = vperm.xlu0 %2183, %v449
    %v2185 = vpop.permute.xlu0 %2184
    %2187 = vset.pattern.permute.xlu0 5
    %2188 = vperm.xlu0 %2187, %v452
    %v2189 = vpop.permute.xlu0 %2188
    %2191 = vset.pattern.permute.xlu0 5
    %2192 = vperm.xlu0 %2191, %v457
    %v2193 = vpop.permute.xlu0 %2192
    %2195 = vset.pattern.permute.xlu0 5
    %2196 = vperm.xlu0 %2195, %v460
    %v2197 = vpop.permute.xlu0 %2196
    %v2199 = vlaneseq
    %v2200 = vshrl.u32 %v2199, 7
    %v2201 = vsub.s32 5, %v2200
    %v2202 = vrot.slane %v502, %v2201
    %v2203 = vadd.f32 %v2169, %v2202
    %v2204 = vadd.f32 %v2173, %v2202
    %v2205 = vadd.f32 %v2177, %v2202
    %v2206 = vadd.f32 %v2181, %v2202
    %v2207 = vadd.f32 %v2185, %v2202
    %v2208 = vadd.f32 %v2189, %v2202
    %v2209 = vadd.f32 %v2193, %v2202
    %v2210 = vadd.f32 %v2197, %v2202
    %vm2211 = vcmp.gt.f32.partialorder %v2203, 0.0
    %vm2212 = vcmp.gt.f32.partialorder %v2204, 0.0
    %vm2213 = vcmp.gt.f32.partialorder %v2205, 0.0
    %vm2214 = vcmp.gt.f32.partialorder %v2206, 0.0
    %vm2215 = vcmp.gt.f32.partialorder %v2207, 0.0
    %vm2216 = vcmp.gt.f32.partialorder %v2208, 0.0
    %vm2217 = vcmp.gt.f32.partialorder %v2209, 0.0
    %vm2218 = vcmp.gt.f32.partialorder %v2210, 0.0
    %v2219 = vmul.f32 %v2203, 0.2
    %v2220 = vmul.f32 %v2204, 0.2
    %v2221 = vmul.f32 %v2205, 0.2
    %v2222 = vmul.f32 %v2206, 0.2
    %v2223 = vmul.f32 %v2207, 0.2
    %v2224 = vmul.f32 %v2208, 0.2
    %v2225 = vmul.f32 %v2209, 0.2
    %v2226 = vmul.f32 %v2210, 0.2
    %v2227 = vsel %vm2211, %v2203, %v2219
    %v2228 = vsel %vm2212, %v2204, %v2220
    %v2229 = vsel %vm2213, %v2205, %v2221
    %v2230 = vsel %vm2214, %v2206, %v2222
    %v2231 = vsel %vm2215, %v2207, %v2223
    %v2232 = vsel %vm2216, %v2208, %v2224
    %v2233 = vsel %vm2217, %v2209, %v2225
    %v2234 = vsel %vm2218, %v2210, %v2226
    %s2235 = scalar_lea.vmem [#allocation5], 80
    %v2236 = vld [vmem:[%s2235] sm:$0xff]
    %v2237 = vld [vmem:[%s2235 + $0x8] sm:$0xff]
    %v2238 = vunpack.c.0.s8 %v2236
    %v2239 = vunpack.c.1.s8 %v2236
    %v2240 = vunpack.c.2.s8 %v2236
    %v2241 = vunpack.c.3.s8 %v2236
    %v2242 = vunpack.c.0.s8 %v2237
    %v2243 = vunpack.c.1.s8 %v2237
    %v2244 = vunpack.c.2.s8 %v2237
    %v2245 = vunpack.c.3.s8 %v2237
    %v2246 = vcvt.s32.f32 %v2238
    %v2247 = vcvt.s32.f32 %v2239
    %v2248 = vcvt.s32.f32 %v2240
    %v2249 = vcvt.s32.f32 %v2241
    %v2250 = vcvt.s32.f32 %v2242
    %v2251 = vcvt.s32.f32 %v2243
    %v2252 = vcvt.s32.f32 %v2244
    %v2253 = vcvt.s32.f32 %v2245
    %vm2254 = vcmp.gt.f32.partialorder %v2246, 0.0
    %vm2255 = vcmp.gt.f32.partialorder %v2247, 0.0
    %vm2256 = vcmp.gt.f32.partialorder %v2248, 0.0
    %vm2257 = vcmp.gt.f32.partialorder %v2249, 0.0
    %vm2258 = vcmp.gt.f32.partialorder %v2250, 0.0
    %vm2259 = vcmp.gt.f32.partialorder %v2251, 0.0
    %vm2260 = vcmp.gt.f32.partialorder %v2252, 0.0
    %vm2261 = vcmp.gt.f32.partialorder %v2253, 0.0
    %v2262 = vsel %vm2254, %v2227, -1e+30
    %v2263 = vsel %vm2255, %v2228, -1e+30
    %v2264 = vsel %vm2256, %v2229, -1e+30
    %v2265 = vsel %vm2257, %v2230, -1e+30
    %v2266 = vsel %vm2258, %v2231, -1e+30
    %v2267 = vsel %vm2259, %v2232, -1e+30
    %v2268 = vsel %vm2260, %v2233, -1e+30
    %v2269 = vsel %vm2261, %v2234, -1e+30
    %v2270 = vsel %vm617, %v2262, -inf
    %2271 = vmax.xlane.f32.xlu0 %v2270
    %v2272 = vpop.xlane.xlu0 %2271
    %v2273 = vsel %vm617, %v2263, -inf
    %2274 = vmax.xlane.f32.xlu0 %v2273
    %v2275 = vpop.xlane.xlu0 %2274
    %v2276 = vsel %vm617, %v2264, -inf
    %2277 = vmax.xlane.f32.xlu0 %v2276
    %v2278 = vpop.xlane.xlu0 %2277
    %v2279 = vsel %vm617, %v2265, -inf
    %2280 = vmax.xlane.f32.xlu0 %v2279
    %v2281 = vpop.xlane.xlu0 %2280
    %v2282 = vsel %vm617, %v2266, -inf
    %2283 = vmax.xlane.f32.xlu0 %v2282
    %v2284 = vpop.xlane.xlu0 %2283
    %v2285 = vsel %vm617, %v2267, -inf
    %2286 = vmax.xlane.f32.xlu0 %v2285
    %v2287 = vpop.xlane.xlu0 %2286
    %v2288 = vsel %vm617, %v2268, -inf
    %2289 = vmax.xlane.f32.xlu0 %v2288
    %v2290 = vpop.xlane.xlu0 %2289
    %v2291 = vsel %vm617, %v2269, -inf
    %2292 = vmax.xlane.f32.xlu0 %v2291
    %v2293 = vpop.xlane.xlu0 %2292
    %v2294 = vmax.f32 %v1962, %v2272
    %v2295 = vmax.f32 %v1963, %v2275
    %v2296 = vmax.f32 %v1964, %v2278
    %v2297 = vmax.f32 %v1965, %v2281
    %v2298 = vmax.f32 %v1966, %v2284
    %v2299 = vmax.f32 %v1967, %v2287
    %v2300 = vmax.f32 %v1968, %v2290
    %v2301 = vmax.f32 %v1969, %v2293
    %v2302 = vsub.f32 %v1962, %v2294
    %v2303 = vsub.f32 %v1963, %v2295
    %v2304 = vsub.f32 %v1964, %v2296
    %v2305 = vsub.f32 %v1965, %v2297
    %v2306 = vsub.f32 %v1966, %v2298
    %v2307 = vsub.f32 %v1967, %v2299
    %v2308 = vsub.f32 %v1968, %v2300
    %v2309 = vsub.f32 %v1969, %v2301
    %v2310 = vmul.f32 %v2302, 1.442695
    %v2311 = vpow.pop %v2310
    %v2312 = vmul.f32 %v2303, 1.442695
    %v2313 = vpow.pop %v2312
    %v2314 = vmul.f32 %v2304, 1.442695
    %v2315 = vpow.pop %v2314
    %v2316 = vmul.f32 %v2305, 1.442695
    %v2317 = vpow.pop %v2316
    %v2318 = vmul.f32 %v2306, 1.442695
    %v2319 = vpow.pop %v2318
    %v2320 = vmul.f32 %v2307, 1.442695
    %v2321 = vpow.pop %v2320
    %v2322 = vmul.f32 %v2308, 1.442695
    %v2323 = vpow.pop %v2322
    %v2324 = vmul.f32 %v2309, 1.442695
    %v2325 = vpow.pop %v2324
    %v2326 = vsub.f32 %v2262, %v2294
    %v2327 = vsub.f32 %v2263, %v2295
    %v2328 = vsub.f32 %v2264, %v2296
    %v2329 = vsub.f32 %v2265, %v2297
    %v2330 = vsub.f32 %v2266, %v2298
    %v2331 = vsub.f32 %v2267, %v2299
    %v2332 = vsub.f32 %v2268, %v2300
    %v2333 = vsub.f32 %v2269, %v2301
    %v2334 = vmul.f32 %v2326, 1.442695
    %v2335 = vpow.pop %v2334
    %v2336 = vmul.f32 %v2327, 1.442695
    %v2337 = vpow.pop %v2336
    %v2338 = vmul.f32 %v2328, 1.442695
    %v2339 = vpow.pop %v2338
    %v2340 = vmul.f32 %v2329, 1.442695
    %v2341 = vpow.pop %v2340
    %v2342 = vmul.f32 %v2330, 1.442695
    %v2343 = vpow.pop %v2342
    %v2344 = vmul.f32 %v2331, 1.442695
    %v2345 = vpow.pop %v2344
    %v2346 = vmul.f32 %v2332, 1.442695
    %v2347 = vpow.pop %v2346
    %v2348 = vmul.f32 %v2333, 1.442695
    %v2349 = vpow.pop %v2348
    %v2350 = vsel %vm2254, %v2335, 0.0
    %v2351 = vsel %vm2255, %v2337, 0.0
    %v2352 = vsel %vm2256, %v2339, 0.0
    %v2353 = vsel %vm2257, %v2341, 0.0
    %v2354 = vsel %vm2258, %v2343, 0.0
    %v2355 = vsel %vm2259, %v2345, 0.0
    %v2356 = vsel %vm2260, %v2347, 0.0
    %v2357 = vsel %vm2261, %v2349, 0.0
    %v2358 = vmul.f32 %v2311, %v2058
    %v2359 = vmul.f32 %v2313, %v2059
    %v2360 = vmul.f32 %v2315, %v2060
    %v2361 = vmul.f32 %v2317, %v2061
    %v2362 = vmul.f32 %v2319, %v2062
    %v2363 = vmul.f32 %v2321, %v2063
    %v2364 = vmul.f32 %v2323, %v2064
    %v2365 = vmul.f32 %v2325, %v2065
    %v2366 = vsel %vm617, %v2350, 0.0
    %2367 = vadd.xlane.f32.xlu0 %v2366
    %v2368 = vpop.xlane.xlu0 %2367
    %v2369 = vsel %vm617, %v2351, 0.0
    %2370 = vadd.xlane.f32.xlu0 %v2369
    %v2371 = vpop.xlane.xlu0 %2370
    %v2372 = vsel %vm617, %v2352, 0.0
    %2373 = vadd.xlane.f32.xlu0 %v2372
    %v2374 = vpop.xlane.xlu0 %2373
    %v2375 = vsel %vm617, %v2353, 0.0
    %2376 = vadd.xlane.f32.xlu0 %v2375
    %v2377 = vpop.xlane.xlu0 %2376
    %v2378 = vsel %vm617, %v2354, 0.0
    %2379 = vadd.xlane.f32.xlu0 %v2378
    %v2380 = vpop.xlane.xlu0 %2379
    %v2381 = vsel %vm617, %v2355, 0.0
    %2382 = vadd.xlane.f32.xlu0 %v2381
    %v2383 = vpop.xlane.xlu0 %2382
    %v2384 = vsel %vm617, %v2356, 0.0
    %2385 = vadd.xlane.f32.xlu0 %v2384
    %v2386 = vpop.xlane.xlu0 %2385
    %v2387 = vsel %vm617, %v2357, 0.0
    %2388 = vadd.xlane.f32.xlu0 %v2387
    %v2389 = vpop.xlane.xlu0 %2388
    %v2390 = vadd.f32 %v2358, %v2368
    %v2391 = vadd.f32 %v2359, %v2371
    %v2392 = vadd.f32 %v2360, %v2374
    %v2393 = vadd.f32 %v2361, %v2377
    %v2394 = vadd.f32 %v2362, %v2380
    %v2395 = vadd.f32 %v2363, %v2383
    %v2396 = vadd.f32 %v2364, %v2386
    %v2397 = vadd.f32 %v2365, %v2389
    %v2398 = vmul.f32 %v2311, %v2159
    %v2399 = vmul.f32 %v2313, %v2160
    %v2400 = vmul.f32 %v2315, %v2161
    %v2401 = vmul.f32 %v2317, %v2162
    %v2402 = vmul.f32 %v2319, %v2163
    %v2403 = vmul.f32 %v2321, %v2164
    %v2404 = vmul.f32 %v2323, %v2165
    %v2405 = vmul.f32 %v2325, %v2166
    %v2406 = vpack.c.bf16 %v2351, %v2350
    %v2407 = vpack.c.bf16 %v2353, %v2352
    %v2408 = vpack.c.bf16 %v2355, %v2354
    %v2409 = vpack.c.bf16 %v2357, %v2356
    %v2410 = vpack.c.bf16 %v366, %v362
    %v2411 = vpack.c.bf16 %v376, %v372
    %v2412 = vpack.c.bf16 %v386, %v382
    %v2413 = vpack.c.bf16 %v396, %v392
    %v2415 = vsel %vm617, %v2406, 0
    %v2418 = vsel %vm617, %v2407, 0
    %v2421 = vsel %vm617, %v2408, 0
    %v2424 = vsel %vm617, %v2409, 0
    %2426 = vmatprep.subr.bf16.mxu0 0
    %2427 = vmatpush1.bf16.msra.mxu0 %v2410
    %2428 = vmatprep.subr.bf16.mxu0 0
    %2429 = vmatpush1.bf16.msra.mxu0 %v2411
    %2430 = vmatprep.subr.bf16.mxu0 0
    %2431 = vmatpush1.bf16.msra.mxu0 %v2412
    %2432 = vmatprep.subr.bf16.mxu0 0
    %2433 = vmatpush1.bf16.msra.mxu0 %v2413
    %2434 = vmatprep.subr.bf16.mxu0 0
    %2435 = vmatpush1.bf16.msra.mxu0 0
    %2436 = vmatprep.subr.bf16.mxu0 0
    %2437 = vmatpush1.bf16.msra.mxu0 0
    %2438 = vmatprep.subr.bf16.mxu0 0
    %2439 = vmatpush1.bf16.msra.mxu0 0
    %2440 = vmatprep.subr.bf16.mxu0 0
    %2441 = vmatpush1.bf16.msra.mxu0 0
    %2442 = vmatprep.subr.bf16.mxu0 0
    %2443 = vmatpush1.bf16.msra.mxu0 0
    %2444 = vmatprep.subr.bf16.mxu0 0
    %2445 = vmatpush1.bf16.msra.mxu0 0
    %2446 = vmatprep.subr.bf16.mxu0 0
    %2447 = vmatpush1.bf16.msra.mxu0 0
    %2448 = vmatprep.subr.bf16.mxu0 0
    %2449 = vmatpush1.bf16.msra.mxu0 0
    %2450 = vmatprep.subr.bf16.mxu0 0
    %2451 = vmatpush1.bf16.msra.mxu0 0
    %2452 = vmatprep.subr.bf16.mxu0 0
    %2453 = vmatpush1.bf16.msra.mxu0 0
    %2454 = vmatprep.subr.bf16.mxu0 0
    %2455 = vmatpush1.bf16.msra.mxu0 0
    %2456 = vmatprep.subr.bf16.mxu0 0
    %2457 = vmatpush1.bf16.msra.mxu0 0
    %2458 = vmatprep.mubr.bf16.mxu0 0
    %2459 = vmatmul.mubr.bf16.gmra.mrb[0].mxu0 %v2415
    %v2460 = vpop.f32.mrb[0].mxu0
    %v2461 = vadd.f32 0.0, %v2460
    %v2462 = vpop.f32.mrb[0].mxu0
    %v2463 = vpop.f32.mrb[0].mxu0
    %v2464 = vadd.f32 0.0, %v2463
    %v2465 = vpop.f32.mrb[0].mxu0
    %2466 = vmatprep.mubr.bf16.mxu0 0
    %2467 = vmatmul.mubr.bf16.gmra.mrb[0].mxu0 %v2418
    %v2468 = vpop.f32.mrb[0].mxu0
    %v2469 = vadd.f32 0.0, %v2468
    %v2470 = vpop.f32.mrb[0].mxu0
    %v2471 = vpop.f32.mrb[0].mxu0
    %v2472 = vadd.f32 0.0, %v2471
    %v2473 = vpop.f32.mrb[0].mxu0
    %2474 = vmatprep.mubr.bf16.mxu0 0
    %2475 = vmatmul.mubr.bf16.gmra.mrb[0].mxu0 %v2421
    %v2476 = vpop.f32.mrb[0].mxu0
    %v2477 = vadd.f32 0.0, %v2476
    %v2478 = vpop.f32.mrb[0].mxu0
    %v2479 = vpop.f32.mrb[0].mxu0
    %v2480 = vadd.f32 0.0, %v2479
    %v2481 = vpop.f32.mrb[0].mxu0
    %2482 = vmatprep.mubr.bf16.mxu0 0
    %2483 = vmatmul.mubr.bf16.gmra.mrb[0].mxu0 %v2424
    %v2484 = vpop.f32.mrb[0].mxu0
    %v2485 = vadd.f32 0.0, %v2484
    %v2486 = vpop.f32.mrb[0].mxu0
    %v2487 = vpop.f32.mrb[0].mxu0
    %v2488 = vadd.f32 0.0, %v2487
    %v2489 = vpop.f32.mrb[0].mxu0
    %2490 = vdwg.mxu0
    %v2491 = vadd.f32 %v2398, %v2461
    %v2492 = vadd.f32 %v2399, %v2464
    %v2493 = vadd.f32 %v2400, %v2469
    %v2494 = vadd.f32 %v2401, %v2472
    %v2495 = vadd.f32 %v2402, %v2477
    %v2496 = vadd.f32 %v2403, %v2480
    %v2497 = vadd.f32 %v2404, %v2485
    %v2498 = vadd.f32 %v2405, %v2488
    %v2499 = vmax.f32 %v2390, 1e-12
    %v2500 = vmax.f32 %v2391, 1e-12
    %v2501 = vmax.f32 %v2392, 1e-12
    %v2502 = vmax.f32 %v2393, 1e-12
    %v2503 = vmax.f32 %v2394, 1e-12
    %v2504 = vmax.f32 %v2395, 1e-12
    %v2505 = vmax.f32 %v2396, 1e-12
    %v2506 = vmax.f32 %v2397, 1e-12
    %v2507 = vrcp.pop %v2499
    %v2508 = vrcp.pop %v2500
    %v2509 = vrcp.pop %v2501
    %v2510 = vrcp.pop %v2502
    %v2511 = vrcp.pop %v2503
    %v2512 = vrcp.pop %v2504
    %v2513 = vrcp.pop %v2505
    %v2514 = vrcp.pop %v2506
    %v2515 = vmul.f32 %v2491, %v2507
    %v2516 = vmul.f32 %v2492, %v2508
    %v2517 = vmul.f32 %v2493, %v2509
    %v2518 = vmul.f32 %v2494, %v2510
    %v2519 = vmul.f32 %v2495, %v2511
    %v2520 = vmul.f32 %v2496, %v2512
    %v2521 = vmul.f32 %v2497, %v2513
    %v2522 = vmul.f32 %v2498, %v2514
    %v2523 = vld [vmem:[%s4] sm:$0x1]
    %v2525 = vlaneseq
    %v2526 = vshrl.u32 %v2525, 7
    %v2527 = vsub.s32 0, %v2526
    %v2528 = vrot.slane %v2523, %v2527
    %v2530 = vadd.f32 %v2515, %v2528
    %v2531 = vadd.f32 %v2516, %v2528
    %v2532 = vadd.f32 %v2517, %v2528
    %v2533 = vadd.f32 %v2518, %v2528
    %v2534 = vadd.f32 %v2519, %v2528
    %v2535 = vadd.f32 %v2520, %v2528
    %v2536 = vadd.f32 %v2521, %v2528
    %v2537 = vadd.f32 %v2522, %v2528
    %2538 = vst [vmem:[#allocation7] sm:$0xff] %v2530
    %2539 = vst [vmem:[#allocation7 + $0x8] sm:$0xff] %v2531
    %2540 = vst [vmem:[#allocation7 + $0x10] sm:$0xff] %v2532
    %2541 = vst [vmem:[#allocation7 + $0x18] sm:$0xff] %v2533
    %2542 = vst [vmem:[#allocation7 + $0x20] sm:$0xff] %v2534
    %2543 = vst [vmem:[#allocation7 + $0x28] sm:$0xff] %v2535
    %2544 = vst [vmem:[#allocation7 + $0x30] sm:$0xff] %v2536
    %2545 = vst [vmem:[#allocation7 + $0x38] sm:$0xff] %v2537
    // Predicated region
    $region30: #{tpu_custom_call.1} parent=1 // pred_check
      _
    $region31: #{tpu_custom_call.1} parent=1 // pred_check_branch
      %2547 = sbr.rel (0) target = $region33
    $region32: #{tpu_custom_call.1} parent=1 // pred_region
      %s2549 = ssub.s32 1024, 1024
      %2550 = vsyncadd [#allocation4], %s2549
      %s2551 = sshll.u32 [#allocation7], 4
      %s2552 = int_to_ptr.vmem [resolvable:$true] %s2551
      %2557 = dma.vmem_to_hbm [thread:$0]  %s2552, 1024, %s5, [#allocation4], 128, 128, 8
    $region33: #{tpu_custom_call.1} parent=1 // pred_fallthru
      _
    // Predicated region
    $region34: #{tpu_custom_call.1} parent=1 // pred_check
      _
    $region35: #{tpu_custom_call.1} parent=1 // pred_check_branch
      %2559 = sbr.rel (0) target = $region37
    $region36: #{tpu_custom_call.1} parent=1 // pred_region
      %2560 = dma.done [#allocation4], 1024
    $region37: #{tpu_custom_call.1} parent=1 // pred_fallthru
      _
    %2561 = vsyncpa [#allocation3], 1
    %2562 = vsyncpa [#allocation6], 1
    %2563 = vsyncpa [#allocation4], 1

</llo_original>
